<compile_context>
chip_gen: v6e
topology: v6e:2x2x1
jax: 0.10.0
libtpu: 0.0.40
codegen_flags: <defaults>
</compile_context>

<pallas_src>
import functools

import jax
import jax.numpy as jnp
from jax.experimental import pallas as pl
from jax.experimental.pallas import tpu as pltpu


HIDDEN1 = 400
HIDDEN2 = 300
H1_PAD = 512   # 400 padded up to a multiple of 128
H2_PAD = 384   # 300 padded up to a multiple of 128


def _round_up(x, m):
    return ((x + m - 1) // m) * m


# --------------------------------------------------------------------------
# Kernel
# --------------------------------------------------------------------------
def _ensemble_critic_kernel(
    state_ref, action_ref,
    w1s_ref, w1a_ref, b1_ref,          # fused layer-1 (both heads), rows split
    w2_ref, b2_ref, w5_ref, b5_ref,    # layer-2, one per head
    w3_ref, b3_ref, w6_ref, b6_ref,    # final projection as a row vector
    qs_ref, std_ref,
):
    # ---- Layer 1: one fused (TB, D) @ (D, 2*H1_PAD) pass for both heads ----
    s = state_ref[...].astype(jnp.bfloat16)
    a = action_ref[...].astype(jnp.bfloat16)
    h1 = (
        jnp.dot(s, w1s_ref[...], preferred_element_type=jnp.float32)
        + jnp.dot(a, w1a_ref[...], preferred_element_type=jnp.float32)
        + b1_ref[...]
    )
    h1 = jnp.maximum(h1, 0.0)                      # (TB, 2*H1_PAD) f32

    # Split at a 128-aligned lane boundary; only the dot operands go bf16.
    h1_1 = h1[:, :H1_PAD].astype(jnp.bfloat16)
    h1_2 = h1[:, H1_PAD:].astype(jnp.bfloat16)

    # ---- Layer 2 per head (bf16 operands, f32 MXU accumulation) ----
    h2_1 = jnp.maximum(
        jnp.dot(h1_1, w2_ref[...], preferred_element_type=jnp.float32)
        + b2_ref[...], 0.0)
    h2_2 = jnp.maximum(
        jnp.dot(h1_2, w5_ref[...], preferred_element_type=jnp.float32)
        + b5_ref[...], 0.0)

    # ---- Final N=1 projection on VPU/XLU (no near-empty MXU pass) ----
    q1 = jnp.sum(h2_1 * w3_ref[...], axis=-1, keepdims=True) + b3_ref[...]
    q2 = jnp.sum(h2_2 * w6_ref[...], axis=-1, keepdims=True) + b6_ref[...]

    qs_ref[0] = q1
    qs_ref[1] = q2
    # Population std (unbiased=False) of a 2-member ensemble is exactly
    # |q1 - q2| / 2, matching torch.std(all_qs, dim=0, unbiased=False).
    std_ref[...] = jnp.abs(q1 - q2) * 0.5


# --------------------------------------------------------------------------
# Parameter packing (padding, bf16 casts, layer-1 fusion) — done once.
# --------------------------------------------------------------------------
def pack_params(params, state_dim, action_dim):
    f32 = jnp.float32

    def pad_w(w, rows, cols):
        w = jnp.asarray(w, f32)
        return jnp.pad(w, ((0, rows - w.shape[0]), (0, cols - w.shape[1])))

    def pad_row(b, cols):
        b = jnp.asarray(b, f32).reshape(-1)
        return jnp.pad(b, (0, cols - b.shape[0]))[None, :]

    d_in = state_dim + action_dim
    # Fused layer-1: columns [0:H1_PAD) = head 1, [H1_PAD:2*H1_PAD) = head 2.
    w1f = jnp.concatenate(
        [pad_w(params["w1"], d_in, H1_PAD), pad_w(params["w4"], d_in, H1_PAD)],
        axis=1)
    b1f = jnp.concatenate(
        [pad_row(params["b1"], H1_PAD), pad_row(params["b4"], H1_PAD)], axis=1)

    return dict(
        w1s=w1f[:state_dim].astype(jnp.bfloat16),   # (state_dim, 1024) bf16
        w1a=w1f[state_dim:].astype(jnp.bfloat16),   # (action_dim, 1024) bf16
        b1=b1f,                                      # (1, 1024) f32
        w2=pad_w(params["w2"], H1_PAD, H2_PAD).astype(jnp.bfloat16),
        b2=pad_row(params["b2"], H2_PAD),
        w5=pad_w(params["w5"], H1_PAD, H2_PAD).astype(jnp.bfloat16),
        b5=pad_row(params["b5"], H2_PAD),
        w3=pad_row(params["w3"], H2_PAD),            # (1, 384) f32 row vector
        b3=jnp.asarray(params["b3"], f32).reshape(1, 1),
        w6=pad_row(params["w6"], H2_PAD),
        b6=jnp.asarray(params["b6"], f32).reshape(1, 1),
    )


# --------------------------------------------------------------------------
# Forward wrapper
# --------------------------------------------------------------------------
@functools.partial(jax.jit, static_argnames=("with_var", "batch_tile"))
def ensemble_critic_forward(state, action, packed, with_var=False,
                            batch_tile=256):
    """JAX wrapper mirroring EnsembleCritic.forward."""
    state = jnp.asarray(state, jnp.float32)
    action = jnp.asarray(action, jnp.float32)
    B = state.shape[0]

    # Modest batch tile (weights stay resident, bigger tiles buy nothing and
    # v7x has less VMEM); pad batch up to a multiple of the tile.
    tb = min(batch_tile, _round_up(B, 8))
    bp = _round_up(B, tb)
    if bp != B:
        state = jnp.pad(state, ((0, bp - B), (0, 0)))
        action = jnp.pad(action, ((0, bp - B), (0, 0)))

    s_dim = state.shape[1]
    a_dim = action.shape[1]
    grid = (bp // tb,)

    def row_map(i):
        return (i, 0)

    def const_map(i):
        return (0, 0)

    in_specs = [
        pl.BlockSpec((tb, s_dim), row_map),            # state
        pl.BlockSpec((tb, a_dim), row_map),            # action
        pl.BlockSpec((s_dim, 2 * H1_PAD), const_map),  # w1s (resident)
        pl.BlockSpec((a_dim, 2 * H1_PAD), const_map),  # w1a
        pl.BlockSpec((1, 2 * H1_PAD), const_map),      # b1
        pl.BlockSpec((H1_PAD, H2_PAD), const_map),     # w2
        pl.BlockSpec((1, H2_PAD), const_map),          # b2
        pl.BlockSpec((H1_PAD, H2_PAD), const_map),     # w5
        pl.BlockSpec((1, H2_PAD), const_map),          # b5
        pl.BlockSpec((1, H2_PAD), const_map),          # w3 row
        pl.BlockSpec((1, 1), const_map),               # b3
        pl.BlockSpec((1, H2_PAD), const_map),          # w6 row
        pl.BlockSpec((1, 1), const_map),               # b6
    ]
    out_specs = (
        pl.BlockSpec((2, tb, 1), lambda i: (0, i, 0)),  # all_qs
        pl.BlockSpec((tb, 1), row_map),                 # std_q
    )
    out_shape = (
        jax.ShapeDtypeStruct((2, bp, 1), jnp.float32),
        jax.ShapeDtypeStruct((bp, 1), jnp.float32),
    )

    all_qs, std_q = pl.pallas_call(
        _ensemble_critic_kernel,
        grid=grid,
        in_specs=in_specs,
        out_specs=out_specs,
        out_shape=out_shape,
        compiler_params=pltpu.CompilerParams(
            dimension_semantics=("parallel",)),
    )(
        state, action,
        packed["w1s"], packed["w1a"], packed["b1"],
        packed["w2"], packed["b2"], packed["w5"], packed["b5"],
        packed["w3"], packed["b3"], packed["w6"], packed["b6"],
    )

    all_qs = all_qs[:, :B, :]
    std_q = std_q[:B, :]
    if with_var:
        return all_qs, std_q
    return all_qs


# --------------------------------------------------------------------------
# Parameter init (nn.Linear-style shapes: W (in, out), b (out,))
# --------------------------------------------------------------------------
def init_params(key, state_dim, action_dim):
    d_in = state_dim + action_dim
    keys = jax.random.split(key, 6)

    def linear(k, fan_in, fan_out):
        bound = 1.0 / jnp.sqrt(jnp.float32(fan_in))
        kw, kb = jax.random.split(k)
        w = jax.random.uniform(kw, (fan_in, fan_out), jnp.float32, -bound, bound)
        b = jax.random.uniform(kb, (fan_out,), jnp.float32, -bound, bound)
        return w, b

    w1, b1 = linear(keys[0], d_in, HIDDEN1)
    w2, b2 = linear(keys[1], HIDDEN1, HIDDEN2)
    w3, b3 = linear(keys[2], HIDDEN2, 1)
    w4, b4 = linear(keys[3], d_in, HIDDEN1)
    w5, b5 = linear(keys[4], HIDDEN1, HIDDEN2)
    w6, b6 = linear(keys[5], HIDDEN2, 1)
    return dict(w1=w1, b1=b1, w2=w2, b2=b2, w3=w3, b3=b3,
                w4=w4, b4=b4, w5=w5, b5=b5, w6=w6, b6=b6)


# --------------------------------------------------------------------------
# References
# --------------------------------------------------------------------------
def _reference_forward_f32(state, action, params):
    """Exact f32 reference (original module semantics)."""
    x = jnp.concatenate([state, action], axis=1)

    def head(w1, b1, w2, b2, w3, b3):
        h1 = jnp.maximum(x @ w1 + b1[None, :], 0.0)
        h2 = jnp.maximum(h1 @ w2 + b2[None, :], 0.0)
        return h2 @ w3 + b3[None, :]

    q1 = head(params["w1"], params["b1"], params["w2"], params["b2"],
              params["w3"], params["b3"])
    q2 = head(params["w4"], params["b4"], params["w5"], params["b5"],
              params["w6"], params["b6"])
    all_qs = jnp.stack([q1, q2], axis=0)
    std_q = jnp.std(all_qs, axis=0)  # population std (unbiased=False)
    return all_qs, std_q


def _reference_forward_bf16(state, action, params):
    """Reference emulating the kernel's bf16-operand / f32-accum numerics."""
    bf = lambda t: jnp.asarray(t, jnp.float32).astype(jnp.bfloat16).astype(jnp.float32)
    x = jnp.concatenate([bf(state), bf(action)], axis=1)

    def head(w1, b1, w2, b2, w3, b3):
        h1 = jnp.maximum(x @ bf(w1) + jnp.reshape(b1, (1, -1)), 0.0)
        h2 = jnp.maximum(bf(h1) @ bf(w2) + jnp.reshape(b2, (1, -1)), 0.0)
        return h2 @ jnp.asarray(w3, jnp.float32) + jnp.reshape(b3, (1, -1))

    q1 = head(params["w1"], params["b1"], params["w2"], params["b2"],
              params["w3"], params["b3"])
    q2 = head(params["w4"], params["b4"], params["w5"], params["b5"],
              params["w6"], params["b6"])
    all_qs = jnp.stack([q1, q2], axis=0)
    std_q = jnp.std(all_qs, axis=0)
    return all_qs, std_q


if __name__ == "__main__":
    batch = 8
    state_dim = 12
    action_dim = 4

    key = jax.random.PRNGKey(0)
    k_state, k_action, k_params = jax.random.split(key, 3)
    state = jax.random.normal(k_state, (batch, state_dim), jnp.float32)
    action = jax.random.normal(k_action, (batch, action_dim), jnp.float32)
    params = init_params(k_params, state_dim, action_dim)
    packed = pack_params(params, state_dim, action_dim)

    all_qs, std_q = ensemble_critic_forward(state, action, packed, with_var=True)
    all_qs = jax.block_until_ready(all_qs)
    std_q = jax.block_until_ready(std_q)

    assert all_qs.shape == (2, batch, 1)
    assert std_q.shape == (batch, 1)

    # Tight check against a reference with matching bf16-weight numerics.
    ref_qs_bf, ref_std_bf = _reference_forward_bf16(state, action, params)
    assert jnp.allclose(all_qs, ref_qs_bf, atol=2e-3, rtol=2e-3)
    assert jnp.allclose(std_q, ref_std_bf, atol=2e-3, rtol=2e-3)

    # Loose check against the exact f32 module semantics.
    ref_qs, ref_std = _reference_forward_f32(state, action, params)
    assert jnp.allclose(all_qs, ref_qs, atol=1e-1, rtol=1e-1)
    assert jnp.allclose(std_q, ref_std, atol=1e-1, rtol=1e-1)

    # with_var=False path.
    only_qs = jax.block_until_ready(
        ensemble_critic_forward(state, action, packed, with_var=False))
    assert only_qs.shape == (2, batch, 1)
    assert jnp.allclose(only_qs, all_qs)

    # Exercise the multi-tile batch grid (weights stay VMEM-resident).
    big_b = 48
    kb1, kb2 = jax.random.split(jax.random.PRNGKey(1))
    bstate = jax.random.normal(kb1, (big_b, state_dim), jnp.float32)
    baction = jax.random.normal(kb2, (big_b, action_dim), jnp.float32)
    bqs, bstd = ensemble_critic_forward(bstate, baction, packed,
                                        with_var=True, batch_tile=16)
    bqs = jax.block_until_ready(bqs)
    rqs, rstd = _reference_forward_bf16(bstate, baction, params)
    assert bqs.shape == (2, big_b, 1) and bstd.shape == (big_b, 1)
    assert jnp.allclose(bqs, rqs, atol=2e-3, rtol=2e-3)
    assert jnp.allclose(bstd, rstd, atol=2e-3, rtol=2e-3)

    print("KERNEL_OK")
</pallas_src>

<mosaic_0001>
module attributes {stable_mosaic.version = 11 : i64} {
  func.func @_ensemble_critic_kernel(%arg0: i32, %arg1: memref<8x12xf32, #tpu.memory_space<vmem>>, %arg2: memref<8x4xf32, #tpu.memory_space<vmem>>, %arg3: memref<12x1024xbf16, #tpu.memory_space<vmem>>, %arg4: memref<4x1024xbf16, #tpu.memory_space<vmem>>, %arg5: memref<1x1024xf32, #tpu.memory_space<vmem>>, %arg6: memref<512x384xbf16, #tpu.memory_space<vmem>>, %arg7: memref<1x384xf32, #tpu.memory_space<vmem>>, %arg8: memref<512x384xbf16, #tpu.memory_space<vmem>>, %arg9: memref<1x384xf32, #tpu.memory_space<vmem>>, %arg10: memref<1x384xf32, #tpu.memory_space<vmem>>, %arg11: memref<1x1xf32, #tpu.memory_space<vmem>>, %arg12: memref<1x384xf32, #tpu.memory_space<vmem>>, %arg13: memref<1x1xf32, #tpu.memory_space<vmem>>, %arg14: memref<2x8x1xf32, #tpu.memory_space<vmem>>, %arg15: memref<8x1xf32, #tpu.memory_space<vmem>>) attributes {dimension_semantics = [#tpu.dimension_semantics<parallel>], iteration_bounds = array<i64: 1>, scalar_prefetch = 0 : i64, scratch_operands = 0 : i64, tpu.core_type = #tpu.core_type<tc>, window_params = [{transform_indices = @transform_0, window_bounds = array<i64: 8, 12>}, {transform_indices = @transform_1, window_bounds = array<i64: 8, 4>}, {pipeline_mode = #tpu.pipeline_mode<synchronous>, transform_indices = @transform_2, window_bounds = array<i64: 12, 1024>}, {pipeline_mode = #tpu.pipeline_mode<synchronous>, transform_indices = @transform_3, window_bounds = array<i64: 4, 1024>}, {pipeline_mode = #tpu.pipeline_mode<synchronous>, transform_indices = @transform_4, window_bounds = array<i64: 1, 1024>}, {pipeline_mode = #tpu.pipeline_mode<synchronous>, transform_indices = @transform_5, window_bounds = array<i64: 512, 384>}, {pipeline_mode = #tpu.pipeline_mode<synchronous>, transform_indices = @transform_6, window_bounds = array<i64: 1, 384>}, {pipeline_mode = #tpu.pipeline_mode<synchronous>, transform_indices = @transform_7, window_bounds = array<i64: 512, 384>}, {pipeline_mode = #tpu.pipeline_mode<synchronous>, transform_indices = @transform_8, window_bounds = array<i64: 1, 384>}, {pipeline_mode = #tpu.pipeline_mode<synchronous>, transform_indices = @transform_9, window_bounds = array<i64: 1, 384>}, {pipeline_mode = #tpu.pipeline_mode<synchronous>, transform_indices = @transform_10, window_bounds = array<i64: 1, 1>}, {pipeline_mode = #tpu.pipeline_mode<synchronous>, transform_indices = @transform_11, window_bounds = array<i64: 1, 384>}, {pipeline_mode = #tpu.pipeline_mode<synchronous>, transform_indices = @transform_12, window_bounds = array<i64: 1, 1>}, {transform_indices = @transform_13, window_bounds = array<i64: 2, 8, 1>}, {transform_indices = @transform_14, window_bounds = array<i64: 8, 1>}]} {
    %c0 = arith.constant 0 : index
    %c0_0 = arith.constant 0 : index
    %0 = vector.load %arg1[%c0, %c0_0] : memref<8x12xf32, #tpu.memory_space<vmem>>, vector<8x12xf32>
    %1 = arith.truncf %0 : vector<8x12xf32> to vector<8x12xbf16>
    %c0_1 = arith.constant 0 : index
    %c0_2 = arith.constant 0 : index
    %2 = vector.load %arg2[%c0_1, %c0_2] : memref<8x4xf32, #tpu.memory_space<vmem>>, vector<8x4xf32>
    %3 = arith.truncf %2 : vector<8x4xf32> to vector<8x4xbf16>
    %c0_3 = arith.constant 0 : index
    %c0_4 = arith.constant 0 : index
    %4 = vector.load %arg3[%c0_3, %c0_4] : memref<12x1024xbf16, #tpu.memory_space<vmem>>, vector<12x1024xbf16>
    %cst = arith.constant dense<0.000000e+00> : vector<8x1024xf32>
    %5 = tpu.matmul %1, %4, %cst {dimension_numbers = #tpu.dot_dimension_numbers<[1], [0], [0], [1], [0, 0, 1, 1], [], []>} : vector<8x12xbf16>, vector<12x1024xbf16>, vector<8x1024xf32> -> vector<8x1024xf32>
    %c0_5 = arith.constant 0 : index
    %c0_6 = arith.constant 0 : index
    %6 = vector.load %arg4[%c0_5, %c0_6] : memref<4x1024xbf16, #tpu.memory_space<vmem>>, vector<4x1024xbf16>
    %cst_7 = arith.constant dense<0.000000e+00> : vector<8x1024xf32>
    %7 = tpu.matmul %3, %6, %cst_7 {dimension_numbers = #tpu.dot_dimension_numbers<[1], [0], [0], [1], [0, 0, 1, 1], [], []>} : vector<8x4xbf16>, vector<4x1024xbf16>, vector<8x1024xf32> -> vector<8x1024xf32>
    %8 = arith.addf %5, %7 : vector<8x1024xf32>
    %c0_8 = arith.constant 0 : index
    %c0_9 = arith.constant 0 : index
    %9 = vector.load %arg5[%c0_8, %c0_9] : memref<1x1024xf32, #tpu.memory_space<vmem>>, vector<1x1024xf32>
    %10 = vector.broadcast %9 : vector<1x1024xf32> to vector<8x1024xf32>
    %11 = arith.addf %8, %10 : vector<8x1024xf32>
    %cst_10 = arith.constant 0.000000e+00 : f32
    %12 = vector.broadcast %cst_10 : f32 to vector<8x1024xf32>
    %13 = arith.maximumf %11, %12 : vector<8x1024xf32>
    %14 = vector.extract_strided_slice %13 {offsets = [0, 0], sizes = [8, 512], strides = [1, 1]} : vector<8x1024xf32> to vector<8x512xf32>
    %15 = arith.truncf %14 : vector<8x512xf32> to vector<8x512xbf16>
    %16 = vector.extract_strided_slice %13 {offsets = [0, 512], sizes = [8, 512], strides = [1, 1]} : vector<8x1024xf32> to vector<8x512xf32>
    %17 = arith.truncf %16 : vector<8x512xf32> to vector<8x512xbf16>
    %c0_11 = arith.constant 0 : index
    %c0_12 = arith.constant 0 : index
    %18 = vector.load %arg6[%c0_11, %c0_12] : memref<512x384xbf16, #tpu.memory_space<vmem>>, vector<512x384xbf16>
    %cst_13 = arith.constant dense<0.000000e+00> : vector<8x384xf32>
    %19 = tpu.matmul %15, %18, %cst_13 {dimension_numbers = #tpu.dot_dimension_numbers<[1], [0], [0], [1], [0, 0, 1, 1], [], []>} : vector<8x512xbf16>, vector<512x384xbf16>, vector<8x384xf32> -> vector<8x384xf32>
    %c0_14 = arith.constant 0 : index
    %c0_15 = arith.constant 0 : index
    %20 = vector.load %arg7[%c0_14, %c0_15] : memref<1x384xf32, #tpu.memory_space<vmem>>, vector<1x384xf32>
    %21 = vector.broadcast %20 : vector<1x384xf32> to vector<8x384xf32>
    %22 = arith.addf %19, %21 : vector<8x384xf32>
    %cst_16 = arith.constant 0.000000e+00 : f32
    %23 = vector.broadcast %cst_16 : f32 to vector<8x384xf32>
    %24 = arith.maximumf %22, %23 : vector<8x384xf32>
    %c0_17 = arith.constant 0 : index
    %c0_18 = arith.constant 0 : index
    %25 = vector.load %arg8[%c0_17, %c0_18] : memref<512x384xbf16, #tpu.memory_space<vmem>>, vector<512x384xbf16>
    %cst_19 = arith.constant dense<0.000000e+00> : vector<8x384xf32>
    %26 = tpu.matmul %17, %25, %cst_19 {dimension_numbers = #tpu.dot_dimension_numbers<[1], [0], [0], [1], [0, 0, 1, 1], [], []>} : vector<8x512xbf16>, vector<512x384xbf16>, vector<8x384xf32> -> vector<8x384xf32>
    %c0_20 = arith.constant 0 : index
    %c0_21 = arith.constant 0 : index
    %27 = vector.load %arg9[%c0_20, %c0_21] : memref<1x384xf32, #tpu.memory_space<vmem>>, vector<1x384xf32>
    %28 = vector.broadcast %27 : vector<1x384xf32> to vector<8x384xf32>
    %29 = arith.addf %26, %28 : vector<8x384xf32>
    %cst_22 = arith.constant 0.000000e+00 : f32
    %30 = vector.broadcast %cst_22 : f32 to vector<8x384xf32>
    %31 = arith.maximumf %29, %30 : vector<8x384xf32>
    %c0_23 = arith.constant 0 : index
    %c0_24 = arith.constant 0 : index
    %32 = vector.load %arg10[%c0_23, %c0_24] : memref<1x384xf32, #tpu.memory_space<vmem>>, vector<1x384xf32>
    %33 = vector.broadcast %32 : vector<1x384xf32> to vector<8x384xf32>
    %34 = arith.mulf %24, %33 : vector<8x384xf32>
    %cst_25 = arith.constant dense<0.000000e+00> : vector<8xf32>
    %35 = vector.multi_reduction <add>, %34, %cst_25 [1] : vector<8x384xf32> to vector<8xf32>
    %36 = vector.shape_cast %35 : vector<8xf32> to vector<8x1xf32>
    %c0_26 = arith.constant 0 : index
    %c0_27 = arith.constant 0 : index
    %37 = vector.load %arg11[%c0_26, %c0_27] : memref<1x1xf32, #tpu.memory_space<vmem>>, vector<1x1xf32>
    %38 = vector.broadcast %37 : vector<1x1xf32> to vector<8x1xf32>
    %39 = arith.addf %36, %38 : vector<8x1xf32>
    %c0_28 = arith.constant 0 : index
    %c0_29 = arith.constant 0 : index
    %40 = vector.load %arg12[%c0_28, %c0_29] : memref<1x384xf32, #tpu.memory_space<vmem>>, vector<1x384xf32>
    %41 = vector.broadcast %40 : vector<1x384xf32> to vector<8x384xf32>
    %42 = arith.mulf %31, %41 : vector<8x384xf32>
    %cst_30 = arith.constant dense<0.000000e+00> : vector<8xf32>
    %43 = vector.multi_reduction <add>, %42, %cst_30 [1] : vector<8x384xf32> to vector<8xf32>
    %44 = vector.shape_cast %43 : vector<8xf32> to vector<8x1xf32>
    %c0_31 = arith.constant 0 : index
    %c0_32 = arith.constant 0 : index
    %45 = vector.load %arg13[%c0_31, %c0_32] : memref<1x1xf32, #tpu.memory_space<vmem>>, vector<1x1xf32>
    %46 = vector.broadcast %45 : vector<1x1xf32> to vector<8x1xf32>
    %47 = arith.addf %44, %46 : vector<8x1xf32>
    %c0_33 = arith.constant 0 : index
    %c0_34 = arith.constant 0 : index
    %c0_35 = arith.constant 0 : index
    %48 = vector.load %arg14[%c0_33, %c0_34, %c0_35] : memref<2x8x1xf32, #tpu.memory_space<vmem>>, vector<1x8x1xf32>
    %49 = vector.shape_cast %48 : vector<1x8x1xf32> to vector<8x1xf32>
    %50 = vector.shape_cast %39 : vector<8x1xf32> to vector<1x8x1xf32>
    tpu.vector_store %arg14[%c0_33, %c0_34, %c0_35], %50 {strides = array<i32>} : memref<2x8x1xf32, #tpu.memory_space<vmem>>, vector<1x8x1xf32>,
    %c1 = arith.constant 1 : index
    %c0_36 = arith.constant 0 : index
    %c0_37 = arith.constant 0 : index
    %51 = vector.load %arg14[%c1, %c0_36, %c0_37] : memref<2x8x1xf32, #tpu.memory_space<vmem>>, vector<1x8x1xf32>
    %52 = vector.shape_cast %51 : vector<1x8x1xf32> to vector<8x1xf32>
    %53 = vector.shape_cast %47 : vector<8x1xf32> to vector<1x8x1xf32>
    tpu.vector_store %arg14[%c1, %c0_36, %c0_37], %53 {strides = array<i32>} : memref<2x8x1xf32, #tpu.memory_space<vmem>>, vector<1x8x1xf32>,
    %54 = arith.subf %39, %47 : vector<8x1xf32>
    %55 = math.absf %54 : vector<8x1xf32>
    %cst_38 = arith.constant 5.000000e-01 : f32
    %56 = vector.broadcast %cst_38 : f32 to vector<8x1xf32>
    %57 = arith.mulf %55, %56 : vector<8x1xf32>
    %c0_39 = arith.constant 0 : index
    %c0_40 = arith.constant 0 : index
    %58 = vector.load %arg15[%c0_39, %c0_40] : memref<8x1xf32, #tpu.memory_space<vmem>>, vector<8x1xf32>
    tpu.vector_store %arg15[%c0_39, %c0_40], %57 {strides = array<i32>} : memref<8x1xf32, #tpu.memory_space<vmem>>, vector<8x1xf32>,
    return
  }
  func.func @transform_0(%arg0: i32) -> (i32, i32) {
    %c0_i32 = arith.constant 0 : i32
    %c0_i32_0 = arith.constant 0 : i32
    return %arg0, %c0_i32 : i32, i32
  }
  func.func @transform_1(%arg0: i32) -> (i32, i32) {
    %c0_i32 = arith.constant 0 : i32
    %c0_i32_0 = arith.constant 0 : i32
    return %arg0, %c0_i32 : i32, i32
  }
  func.func @transform_2(%arg0: i32) -> (i32, i32) {
    %c0_i32 = arith.constant 0 : i32
    %c0_i32_0 = arith.constant 0 : i32
    %c0_i32_1 = arith.constant 0 : i32
    return %c0_i32, %c0_i32_0 : i32, i32
  }
  func.func @transform_3(%arg0: i32) -> (i32, i32) {
    %c0_i32 = arith.constant 0 : i32
    %c0_i32_0 = arith.constant 0 : i32
    %c0_i32_1 = arith.constant 0 : i32
    return %c0_i32, %c0_i32_0 : i32, i32
  }
  func.func @transform_4(%arg0: i32) -> (i32, i32) {
    %c0_i32 = arith.constant 0 : i32
    %c0_i32_0 = arith.constant 0 : i32
    %c0_i32_1 = arith.constant 0 : i32
    return %c0_i32, %c0_i32_0 : i32, i32
  }
  func.func @transform_5(%arg0: i32) -> (i32, i32) {
    %c0_i32 = arith.constant 0 : i32
    %c0_i32_0 = arith.constant 0 : i32
    %c0_i32_1 = arith.constant 0 : i32
    return %c0_i32, %c0_i32_0 : i32, i32
  }
  func.func @transform_6(%arg0: i32) -> (i32, i32) {
    %c0_i32 = arith.constant 0 : i32
    %c0_i32_0 = arith.constant 0 : i32
    %c0_i32_1 = arith.constant 0 : i32
    return %c0_i32, %c0_i32_0 : i32, i32
  }
  func.func @transform_7(%arg0: i32) -> (i32, i32) {
    %c0_i32 = arith.constant 0 : i32
    %c0_i32_0 = arith.constant 0 : i32
    %c0_i32_1 = arith.constant 0 : i32
    return %c0_i32, %c0_i32_0 : i32, i32
  }
  func.func @transform_8(%arg0: i32) -> (i32, i32) {
    %c0_i32 = arith.constant 0 : i32
    %c0_i32_0 = arith.constant 0 : i32
    %c0_i32_1 = arith.constant 0 : i32
    return %c0_i32, %c0_i32_0 : i32, i32
  }
  func.func @transform_9(%arg0: i32) -> (i32, i32) {
    %c0_i32 = arith.constant 0 : i32
    %c0_i32_0 = arith.constant 0 : i32
    %c0_i32_1 = arith.constant 0 : i32
    return %c0_i32, %c0_i32_0 : i32, i32
  }
  func.func @transform_10(%arg0: i32) -> (i32, i32) {
    %c0_i32 = arith.constant 0 : i32
    %c0_i32_0 = arith.constant 0 : i32
    %c0_i32_1 = arith.constant 0 : i32
    return %c0_i32, %c0_i32_0 : i32, i32
  }
  func.func @transform_11(%arg0: i32) -> (i32, i32) {
    %c0_i32 = arith.constant 0 : i32
    %c0_i32_0 = arith.constant 0 : i32
    %c0_i32_1 = arith.constant 0 : i32
    return %c0_i32, %c0_i32_0 : i32, i32
  }
  func.func @transform_12(%arg0: i32) -> (i32, i32) {
    %c0_i32 = arith.constant 0 : i32
    %c0_i32_0 = arith.constant 0 : i32
    %c0_i32_1 = arith.constant 0 : i32
    return %c0_i32, %c0_i32_0 : i32, i32
  }
  func.func @transform_13(%arg0: i32) -> (i32, i32, i32) {
    %c0_i32 = arith.constant 0 : i32
    %c0_i32_0 = arith.constant 0 : i32
    %c0_i32_1 = arith.constant 0 : i32
    return %c0_i32, %arg0, %c0_i32_0 : i32, i32, i32
  }
  func.func @transform_14(%arg0: i32) -> (i32, i32) {
    %c0_i32 = arith.constant 0 : i32
    %c0_i32_0 = arith.constant 0 : i32
    return %arg0, %c0_i32 : i32, i32
  }
}

</mosaic_0001>

<llo_original>
// kernel: ensemble_critic_forward.1
$region0: #{ensemble_critic_forward.1}
  #allocation0 [shape = 'u32[]', space=smem, size = 0x4, offset = 0x4, fixed_abs, tag = 'smem constant byte address 0x4 - core index']
  #allocation1 [shape = 'u32[144,128]{1,0:T(1,128)}', space=vmem, size = 0x12000, scoped, tag = 'internal scratch']
  #allocation2 [shape = 'f32[1,1]{1,0:T(1,128)S(1)}', space=vmem, size = 0x200, scoped, tag = 'scoped memory for ensemble_critic_forward.1']
  #allocation3 [shape = 'f32[1,1]{1,0:T(1,128)S(1)}', space=vmem, size = 0x200, scoped, tag = 'scoped memory for ensemble_critic_forward.1']
  %s0 = inlined_call_operand.vmem [shape: f32[8,12], index: 0, kind: input, shape index: {}]
  %s1 = inlined_call_operand.vmem [shape: f32[8,4], index: 1, kind: input, shape index: {}]
  %s2 = inlined_call_operand.hbm [shape: bf16[12,1024], index: 2, kind: input, shape index: {}]
  %s3 = inlined_call_operand.vmem [shape: bf16[4,1024], index: 3, kind: input, shape index: {}]
  %s4 = inlined_call_operand.hbm [shape: f32[1,1024], index: 4, kind: input, shape index: {}]
  %s5 = inlined_call_operand.hbm [shape: bf16[512,384], index: 5, kind: input, shape index: {}]
  %s6 = inlined_call_operand.hbm [shape: f32[1,384], index: 6, kind: input, shape index: {}]
  %s7 = inlined_call_operand.hbm [shape: bf16[512,384], index: 7, kind: input, shape index: {}]
  %s8 = inlined_call_operand.hbm [shape: f32[1,384], index: 8, kind: input, shape index: {}]
  %s9 = inlined_call_operand.vmem [shape: f32[1,384], index: 9, kind: input, shape index: {}]
  %s10 = inlined_call_operand.<no memory space> [shape: f32[1,1], index: 10, kind: input, shape index: {}]
  %s11 = inlined_call_operand.vmem [shape: f32[1,384], index: 11, kind: input, shape index: {}]
  %s12 = inlined_call_operand.<no memory space> [shape: f32[1,1], index: 12, kind: input, shape index: {}]
  %s13 = inlined_call_operand.vmem [shape: f32[2,8,1], index: 13, kind: output, shape index: {0}]
  %s14 = inlined_call_operand.vmem [shape: f32[8,1], index: 14, kind: output, shape index: {1}]
  %15 = xla_tuple %s13, %s14
  %s16 = sld [smem:[#allocation0]]
  $region94: #{ensemble_critic_forward.1} parent=0
    _
  %s18 = ssub.s32 1, %s16
  %s19 = scalar_select 0, %s18, %s16
  %v20 = vstv %s10
  %21 = vst [vmem:[#allocation2] sm:$0x1] %v20
  %v22 = vstv %s12
  %23 = vst [vmem:[#allocation3] sm:$0x1] %v22
  $region1: #{ensemble_critic_forward.1} parent=0
    #allocation4 [shape = 'u8[32768]{0}', space=vmem, size = 0x8000, scoped, tag = 'input window, operand 2, single buffered']
    #allocation5 [shape = 's32[1]{0}', space=sflag, size = 0x4, scoped, tag = 'scoped memory for ensemble_critic_forward.1']
    #allocation6 [shape = 'u8[4096]{0}', space=vmem, size = 0x1000, scoped, tag = 'input window, operand 4, single buffered']
    #allocation7 [shape = 's32[1]{0}', space=sflag, size = 0x4, scoped, tag = 'scoped memory for ensemble_critic_forward.1']
    #allocation8 [shape = 'u8[393216]{0}', space=vmem, size = 0x60000, scoped, tag = 'input window, operand 5, single buffered']
    #allocation9 [shape = 'u8[1536]{0}', space=vmem, size = 0x800, scoped, tag = 'input window, operand 6, single buffered']
    #allocation10 [shape = 's32[1]{0}', space=sflag, size = 0x4, scoped, tag = 'scoped memory for ensemble_critic_forward.1']
    #allocation11 [shape = 'u8[393216]{0}', space=vmem, size = 0x60000, scoped, tag = 'input window, operand 7, single buffered']
    #allocation12 [shape = 'u8[1536]{0}', space=vmem, size = 0x800, scoped, tag = 'input window, operand 8, single buffered']
    #allocation13 [shape = 's32[1]{0}', space=sflag, size = 0x4, scoped, tag = 'scoped memory for ensemble_critic_forward.1']
    %24 = vsyncpa [#allocation5], 0
    %25 = vsyncpa [#allocation7], 0
    %26 = vsyncpa [#allocation10], 0
    %27 = vsyncpa [#allocation13], 0
    // Predicated region
    $region2: #{ensemble_critic_forward.1} parent=1 // pred_check
      _
    $region3: #{ensemble_critic_forward.1} parent=1 // pred_check_branch
      %29 = sbr.rel (0) target = $region5
    $region4: #{ensemble_critic_forward.1} parent=1 // pred_region
      _
    $region5: #{ensemble_critic_forward.1} parent=1 // pred_fallthru
      _
    // Predicated region
    $region6: #{ensemble_critic_forward.1} parent=1 // pred_check
      _
    $region7: #{ensemble_critic_forward.1} parent=1 // pred_check_branch
      %31 = sbr.rel (0) target = $region9
    $region8: #{ensemble_critic_forward.1} parent=1 // pred_region
      _
    $region9: #{ensemble_critic_forward.1} parent=1 // pred_fallthru
      _
    // Predicated region
    $region10: #{ensemble_critic_forward.1} parent=1 // pred_check
      _
    $region11: #{ensemble_critic_forward.1} parent=1 // pred_check_branch
      %33 = sbr.rel (0) target = $region13
    $region12: #{ensemble_critic_forward.1} parent=1 // pred_region
      %s35 = ssub.s32 1024, 1024
      %36 = vsyncadd [#allocation5], %s35
      %s37 = sshll.u32 [#allocation4], 4
      %s38 = int_to_ptr.vmem [resolvable:$true] %s37
      %43 = dma.hbm_to_vmem [thread:$0]  %s2, 1024, %s38, [#allocation5], 512, 512, 32
    $region13: #{ensemble_critic_forward.1} parent=1 // pred_fallthru
      _
    // Predicated region
    $region14: #{ensemble_critic_forward.1} parent=1 // pred_check
      _
    $region15: #{ensemble_critic_forward.1} parent=1 // pred_check_branch
      %45 = sbr.rel (0) target = $region17
    $region16: #{ensemble_critic_forward.1} parent=1 // pred_region
      _
    $region17: #{ensemble_critic_forward.1} parent=1 // pred_fallthru
      _
    // Predicated region
    $region18: #{ensemble_critic_forward.1} parent=1 // pred_check
      _
    $region19: #{ensemble_critic_forward.1} parent=1 // pred_check_branch
      %47 = sbr.rel (0) target = $region21
    $region20: #{ensemble_critic_forward.1} parent=1 // pred_region
      %s49 = ssub.s32 128, 128
      %50 = vsyncadd [#allocation7], %s49
      %s52 = sshll.u32 [#allocation6], 4
      %s53 = int_to_ptr.vmem [resolvable:$true] %s52
      %55 = dma.hbm_to_vmem [thread:$0]  %s4, 128, %s53, [#allocation7]
    $region21: #{ensemble_critic_forward.1} parent=1 // pred_fallthru
      _
    // Predicated region
    $region22: #{ensemble_critic_forward.1} parent=1 // pred_check
      _
    $region23: #{ensemble_critic_forward.1} parent=1 // pred_check_branch
      %57 = sbr.rel (0) target = $region25
    $region24: #{ensemble_critic_forward.1} parent=1 // pred_region
      %s59 = ssub.s32 12288, 12288
      %60 = vsyncadd [#allocation7], %s59
      %s61 = sshll.u32 [#allocation8], 4
      %s62 = int_to_ptr.vmem [resolvable:$true] %s61
      %67 = dma.hbm_to_vmem [thread:$0]  %s5, 12288, %s62, [#allocation7], 192, 192, 12
    $region25: #{ensemble_critic_forward.1} parent=1 // pred_fallthru
      _
    // Predicated region
    $region26: #{ensemble_critic_forward.1} parent=1 // pred_check
      _
    $region27: #{ensemble_critic_forward.1} parent=1 // pred_check_branch
      %69 = sbr.rel (0) target = $region29
    $region28: #{ensemble_critic_forward.1} parent=1 // pred_region
      %s71 = ssub.s32 48, 48
      %72 = vsyncadd [#allocation10], %s71
      %s74 = sshll.u32 [#allocation9], 4
      %s75 = int_to_ptr.vmem [resolvable:$true] %s74
      %77 = dma.hbm_to_vmem [thread:$0]  %s6, 48, %s75, [#allocation10]
    $region29: #{ensemble_critic_forward.1} parent=1 // pred_fallthru
      _
    // Predicated region
    $region30: #{ensemble_critic_forward.1} parent=1 // pred_check
      _
    $region31: #{ensemble_critic_forward.1} parent=1 // pred_check_branch
      %79 = sbr.rel (0) target = $region33
    $region32: #{ensemble_critic_forward.1} parent=1 // pred_region
      %s81 = ssub.s32 12288, 12288
      %82 = vsyncadd [#allocation10], %s81
      %s83 = sshll.u32 [#allocation11], 4
      %s84 = int_to_ptr.vmem [resolvable:$true] %s83
      %89 = dma.hbm_to_vmem [thread:$0]  %s7, 12288, %s84, [#allocation10], 192, 192, 12
    $region33: #{ensemble_critic_forward.1} parent=1 // pred_fallthru
      _
    // Predicated region
    $region34: #{ensemble_critic_forward.1} parent=1 // pred_check
      _
    $region35: #{ensemble_critic_forward.1} parent=1 // pred_check_branch
      %91 = sbr.rel (0) target = $region37
    $region36: #{ensemble_critic_forward.1} parent=1 // pred_region
      %s93 = ssub.s32 48, 48
      %94 = vsyncadd [#allocation13], %s93
      %s96 = sshll.u32 [#allocation12], 4
      %s97 = int_to_ptr.vmem [resolvable:$true] %s96
      %99 = dma.hbm_to_vmem [thread:$0]  %s8, 48, %s97, [#allocation13]
    $region37: #{ensemble_critic_forward.1} parent=1 // pred_fallthru
      _
    // Predicated region
    $region38: #{ensemble_critic_forward.1} parent=1 // pred_check
      _
    $region39: #{ensemble_critic_forward.1} parent=1 // pred_check_branch
      %101 = sbr.rel (0) target = $region41
    $region40: #{ensemble_critic_forward.1} parent=1 // pred_region
      _
    $region41: #{ensemble_critic_forward.1} parent=1 // pred_fallthru
      _
    // Predicated region
    $region42: #{ensemble_critic_forward.1} parent=1 // pred_check
      _
    $region43: #{ensemble_critic_forward.1} parent=1 // pred_check_branch
      %103 = sbr.rel (0) target = $region45
    $region44: #{ensemble_critic_forward.1} parent=1 // pred_region
      _
    $region45: #{ensemble_critic_forward.1} parent=1 // pred_fallthru
      _
    // Predicated region
    $region46: #{ensemble_critic_forward.1} parent=1 // pred_check
      _
    $region47: #{ensemble_critic_forward.1} parent=1 // pred_check_branch
      %105 = sbr.rel (0) target = $region49
    $region48: #{ensemble_critic_forward.1} parent=1 // pred_region
      _
    $region49: #{ensemble_critic_forward.1} parent=1 // pred_fallthru
      _
    // Predicated region
    $region50: #{ensemble_critic_forward.1} parent=1 // pred_check
      _
    $region51: #{ensemble_critic_forward.1} parent=1 // pred_check_branch
      %107 = sbr.rel (0) target = $region53
    $region52: #{ensemble_critic_forward.1} parent=1 // pred_region
      _
    $region53: #{ensemble_critic_forward.1} parent=1 // pred_fallthru
      _
    // Predicated region
    $region54: #{ensemble_critic_forward.1} parent=1 // pred_check
      _
    $region55: #{ensemble_critic_forward.1} parent=1 // pred_check_branch
      %109 = sbr.rel (0) target = $region57
    $region56: #{ensemble_critic_forward.1} parent=1 // pred_region
      %110 = dma.done [#allocation5], 1024
    $region57: #{ensemble_critic_forward.1} parent=1 // pred_fallthru
      _
    // Predicated region
    $region58: #{ensemble_critic_forward.1} parent=1 // pred_check
      _
    $region59: #{ensemble_critic_forward.1} parent=1 // pred_check_branch
      %112 = sbr.rel (0) target = $region61
    $region60: #{ensemble_critic_forward.1} parent=1 // pred_region
      %113 = dma.done [#allocation7], 128
    $region61: #{ensemble_critic_forward.1} parent=1 // pred_fallthru
      _
    // Predicated region
    $region62: #{ensemble_critic_forward.1} parent=1 // pred_check
      _
    $region63: #{ensemble_critic_forward.1} parent=1 // pred_check_branch
      %115 = sbr.rel (0) target = $region65
    $region64: #{ensemble_critic_forward.1} parent=1 // pred_region
      %116 = dma.done [#allocation7], 12288
    $region65: #{ensemble_critic_forward.1} parent=1 // pred_fallthru
      _
    // Predicated region
    $region66: #{ensemble_critic_forward.1} parent=1 // pred_check
      _
    $region67: #{ensemble_critic_forward.1} parent=1 // pred_check_branch
      %118 = sbr.rel (0) target = $region69
    $region68: #{ensemble_critic_forward.1} parent=1 // pred_region
      %119 = dma.done [#allocation10], 48
    $region69: #{ensemble_critic_forward.1} parent=1 // pred_fallthru
      _
    // Predicated region
    $region70: #{ensemble_critic_forward.1} parent=1 // pred_check
      _
    $region71: #{ensemble_critic_forward.1} parent=1 // pred_check_branch
      %121 = sbr.rel (0) target = $region73
    $region72: #{ensemble_critic_forward.1} parent=1 // pred_region
      %122 = dma.done [#allocation10], 12288
    $region73: #{ensemble_critic_forward.1} parent=1 // pred_fallthru
      _
    // Predicated region
    $region74: #{ensemble_critic_forward.1} parent=1 // pred_check
      _
    $region75: #{ensemble_critic_forward.1} parent=1 // pred_check_branch
      %124 = sbr.rel (0) target = $region77
    $region76: #{ensemble_critic_forward.1} parent=1 // pred_region
      %125 = dma.done [#allocation13], 48
    $region77: #{ensemble_critic_forward.1} parent=1 // pred_fallthru
      _
    %v127 = vld [vmem:[%s0] sm:$0xff]
    %v128 = vpack.c.bf16 %v127, %v127
    %v129 = vld [vmem:[%s1] sm:$0xff]
    %v130 = vpack.c.bf16 %v129, %v129
    %v131 = vld [vmem:[#allocation4] sm:$0xff]
    %v132 = vld [vmem:[#allocation4 + $0x8] sm:$0xff]
    %v133 = vld [vmem:[#allocation4 + $0x10] sm:$0xff]
    %v134 = vld [vmem:[#allocation4 + $0x18] sm:$0xff]
    %v135 = vld [vmem:[#allocation4 + $0x20] sm:$0x33]
    %v136 = vld [vmem:[#allocation4 + $0x28] sm:$0x33]
    %v137 = vld [vmem:[#allocation4 + $0x30] sm:$0x33]
    %v138 = vld [vmem:[#allocation4 + $0x38] sm:$0x33]
    %v139 = vld [vmem:[%s3] sm:$0xff]
    %v140 = vld [vmem:[%s3 + $0x8] sm:$0xff]
    %v143 = vcombine.high %v139, %v139
    %v145 = vunpack.c.l.s4 1983009808
    %v146 = vunpack.c.0.s8 %v145
    %v147 = vlaneseq
    %v148 = vshrl.u32 %v147, 7
    %v149 = vsub.s32 %v146, %v148
    %v150 = vrot.slane %v139, %v149
    %v152 = vunpack.c.l.s4 1983009808
    %v153 = vunpack.c.0.s8 %v152
    %v154 = vlaneseq
    %v155 = vshrl.u32 %v154, 7
    %v156 = vsub.s32 %v153, %v155
    %v157 = vrot.slane %v143, %v156
    %v158 = vcombine.high %v150, %v150
    %v159 = vcombine.high %v157, %v157
    %v160 = vcombine.high %v140, %v140
    %v162 = vunpack.c.l.s4 1983009808
    %v163 = vunpack.c.0.s8 %v162
    %v164 = vlaneseq
    %v165 = vshrl.u32 %v164, 7
    %v166 = vsub.s32 %v163, %v165
    %v167 = vrot.slane %v140, %v166
    %v169 = vunpack.c.l.s4 1983009808
    %v170 = vunpack.c.0.s8 %v169
    %v171 = vlaneseq
    %v172 = vshrl.u32 %v171, 7
    %v173 = vsub.s32 %v170, %v172
    %v174 = vrot.slane %v160, %v173
    %v175 = vcombine.high %v167, %v167
    %v176 = vcombine.high %v174, %v174
    %vm177 = vcmask 31744
    %v179 = vsel %vm177, %v130, 0
    %vm181 = vcmask 1041408
    %v183 = vsel %vm181, %v150, 0
    %v186 = vsel %vm181, %v158, 0
    %v189 = vsel %vm181, %v157, 0
    %v192 = vsel %vm181, %v159, 0
    %v195 = vsel %vm181, %v167, 0
    %v198 = vsel %vm181, %v175, 0
    %v201 = vsel %vm181, %v174, 0
    %v204 = vsel %vm181, %v176, 0
    %206 = vmatprep.subr.bf16.mxu0 0
    %207 = vmatpush1.bf16.msra.mxu0 0
    %208 = vmatprep.subr.bf16.mxu0 0
    %209 = vmatpush1.bf16.msra.mxu0 0
    %210 = vmatprep.subr.bf16.mxu0 0
    %211 = vmatpush1.bf16.msra.mxu0 0
    %212 = vmatprep.subr.bf16.mxu0 0
    %213 = vmatpush1.bf16.msra.mxu0 0
    %214 = vmatprep.subr.bf16.mxu0 0
    %215 = vmatpush1.bf16.msra.mxu0 0
    %216 = vmatprep.subr.bf16.mxu0 0
    %217 = vmatpush1.bf16.msra.mxu0 0
    %218 = vmatprep.subr.bf16.mxu0 0
    %219 = vmatpush1.bf16.msra.mxu0 0
    %220 = vmatprep.subr.bf16.mxu0 %v186
    %221 = vmatpush1.bf16.msra.mxu0 %v183
    %222 = vmatprep.subr.bf16.mxu0 0
    %223 = vmatpush2.bf16.msra.mxu0 0
    %224 = vmatprep.subr.bf16.mxu0 0
    %225 = vmatpush2.bf16.msra.mxu0 0
    %226 = vmatprep.subr.bf16.mxu0 0
    %227 = vmatpush2.bf16.msra.mxu0 0
    %228 = vmatprep.subr.bf16.mxu0 0
    %229 = vmatpush2.bf16.msra.mxu0 0
    %230 = vmatprep.subr.bf16.mxu0 0
    %231 = vmatpush2.bf16.msra.mxu0 0
    %232 = vmatprep.subr.bf16.mxu0 0
    %233 = vmatpush2.bf16.msra.mxu0 0
    %234 = vmatprep.subr.bf16.mxu0 0
    %235 = vmatpush2.bf16.msra.mxu0 0
    %236 = vmatprep.subr.bf16.mxu0 0
    %237 = vmatpush2.bf16.msra.mxu0 0
    %238 = vmatprep.mubr.bf16.mxu0 0
    %239 = vmatmul.mubr.bf16.gmra.mxu0 %v179
    %v240 = vpop.f32.mrf.mxu0
    %v241 = vadd.f32 0.0, %v240
    %v242 = vpop.f32.mrf.mxu0
    %v243 = vadd.f32 0.0, %v242
    %v244 = vpop.f32.mrf.mxu0
    %v245 = vpop.f32.mrf.mxu0
    %246 = vdwg.mxu0
    %247 = vmatprep.subr.bf16.mxu0 0
    %248 = vmatpush1.bf16.msra.mxu0 0
    %249 = vmatprep.subr.bf16.mxu0 0
    %250 = vmatpush1.bf16.msra.mxu0 0
    %251 = vmatprep.subr.bf16.mxu0 0
    %252 = vmatpush1.bf16.msra.mxu0 0
    %253 = vmatprep.subr.bf16.mxu0 0
    %254 = vmatpush1.bf16.msra.mxu0 0
    %255 = vmatprep.subr.bf16.mxu0 0
    %256 = vmatpush1.bf16.msra.mxu0 0
    %257 = vmatprep.subr.bf16.mxu0 0
    %258 = vmatpush1.bf16.msra.mxu0 0
    %259 = vmatprep.subr.bf16.mxu0 0
    %260 = vmatpush1.bf16.msra.mxu0 0
    %261 = vmatprep.subr.bf16.mxu0 %v192
    %262 = vmatpush1.bf16.msra.mxu0 %v189
    %263 = vmatprep.subr.bf16.mxu0 0
    %264 = vmatpush2.bf16.msra.mxu0 0
    %265 = vmatprep.subr.bf16.mxu0 0
    %266 = vmatpush2.bf16.msra.mxu0 0
    %267 = vmatprep.subr.bf16.mxu0 0
    %268 = vmatpush2.bf16.msra.mxu0 0
    %269 = vmatprep.subr.bf16.mxu0 0
    %270 = vmatpush2.bf16.msra.mxu0 0
    %271 = vmatprep.subr.bf16.mxu0 0
    %272 = vmatpush2.bf16.msra.mxu0 0
    %273 = vmatprep.subr.bf16.mxu0 0
    %274 = vmatpush2.bf16.msra.mxu0 0
    %275 = vmatprep.subr.bf16.mxu0 0
    %276 = vmatpush2.bf16.msra.mxu0 0
    %277 = vmatprep.subr.bf16.mxu0 0
    %278 = vmatpush2.bf16.msra.mxu0 0
    %279 = vmatprep.mubr.bf16.mxu0 0
    %280 = vmatmul.mubr.bf16.gmra.mxu0 %v179
    %v281 = vpop.f32.mrf.mxu0
    %v282 = vadd.f32 0.0, %v281
    %v283 = vpop.f32.mrf.mxu0
    %v284 = vadd.f32 0.0, %v283
    %v285 = vpop.f32.mrf.mxu0
    %v286 = vpop.f32.mrf.mxu0
    %287 = vdwg.mxu0
    %288 = vmatprep.subr.bf16.mxu0 0
    %289 = vmatpush1.bf16.msra.mxu0 0
    %290 = vmatprep.subr.bf16.mxu0 0
    %291 = vmatpush1.bf16.msra.mxu0 0
    %292 = vmatprep.subr.bf16.mxu0 0
    %293 = vmatpush1.bf16.msra.mxu0 0
    %294 = vmatprep.subr.bf16.mxu0 0
    %295 = vmatpush1.bf16.msra.mxu0 0
    %296 = vmatprep.subr.bf16.mxu0 0
    %297 = vmatpush1.bf16.msra.mxu0 0
    %298 = vmatprep.subr.bf16.mxu0 0
    %299 = vmatpush1.bf16.msra.mxu0 0
    %300 = vmatprep.subr.bf16.mxu0 0
    %301 = vmatpush1.bf16.msra.mxu0 0
    %302 = vmatprep.subr.bf16.mxu0 %v198
    %303 = vmatpush1.bf16.msra.mxu0 %v195
    %304 = vmatprep.subr.bf16.mxu0 0
    %305 = vmatpush2.bf16.msra.mxu0 0
    %306 = vmatprep.subr.bf16.mxu0 0
    %307 = vmatpush2.bf16.msra.mxu0 0
    %308 = vmatprep.subr.bf16.mxu0 0
    %309 = vmatpush2.bf16.msra.mxu0 0
    %310 = vmatprep.subr.bf16.mxu0 0
    %311 = vmatpush2.bf16.msra.mxu0 0
    %312 = vmatprep.subr.bf16.mxu0 0
    %313 = vmatpush2.bf16.msra.mxu0 0
    %314 = vmatprep.subr.bf16.mxu0 0
    %315 = vmatpush2.bf16.msra.mxu0 0
    %316 = vmatprep.subr.bf16.mxu0 0
    %317 = vmatpush2.bf16.msra.mxu0 0
    %318 = vmatprep.subr.bf16.mxu0 0
    %319 = vmatpush2.bf16.msra.mxu0 0
    %320 = vmatprep.mubr.bf16.mxu0 0
    %321 = vmatmul.mubr.bf16.gmra.mxu0 %v179
    %v322 = vpop.f32.mrf.mxu0
    %v323 = vadd.f32 0.0, %v322
    %v324 = vpop.f32.mrf.mxu0
    %v325 = vadd.f32 0.0, %v324
    %v326 = vpop.f32.mrf.mxu0
    %v327 = vpop.f32.mrf.mxu0
    %328 = vdwg.mxu0
    %329 = vmatprep.subr.bf16.mxu0 0
    %330 = vmatpush1.bf16.msra.mxu0 0
    %331 = vmatprep.subr.bf16.mxu0 0
    %332 = vmatpush1.bf16.msra.mxu0 0
    %333 = vmatprep.subr.bf16.mxu0 0
    %334 = vmatpush1.bf16.msra.mxu0 0
    %335 = vmatprep.subr.bf16.mxu0 0
    %336 = vmatpush1.bf16.msra.mxu0 0
    %337 = vmatprep.subr.bf16.mxu0 0
    %338 = vmatpush1.bf16.msra.mxu0 0
    %339 = vmatprep.subr.bf16.mxu0 0
    %340 = vmatpush1.bf16.msra.mxu0 0
    %341 = vmatprep.subr.bf16.mxu0 0
    %342 = vmatpush1.bf16.msra.mxu0 0
    %343 = vmatprep.subr.bf16.mxu0 %v204
    %344 = vmatpush1.bf16.msra.mxu0 %v201
    %345 = vmatprep.subr.bf16.mxu0 0
    %346 = vmatpush2.bf16.msra.mxu0 0
    %347 = vmatprep.subr.bf16.mxu0 0
    %348 = vmatpush2.bf16.msra.mxu0 0
    %349 = vmatprep.subr.bf16.mxu0 0
    %350 = vmatpush2.bf16.msra.mxu0 0
    %351 = vmatprep.subr.bf16.mxu0 0
    %352 = vmatpush2.bf16.msra.mxu0 0
    %353 = vmatprep.subr.bf16.mxu0 0
    %354 = vmatpush2.bf16.msra.mxu0 0
    %355 = vmatprep.subr.bf16.mxu0 0
    %356 = vmatpush2.bf16.msra.mxu0 0
    %357 = vmatprep.subr.bf16.mxu0 0
    %358 = vmatpush2.bf16.msra.mxu0 0
    %359 = vmatprep.subr.bf16.mxu0 0
    %360 = vmatpush2.bf16.msra.mxu0 0
    %361 = vmatprep.mubr.bf16.mxu0 0
    %362 = vmatmul.mubr.bf16.gmra.mxu0 %v179
    %v363 = vpop.f32.mrf.mxu0
    %v364 = vadd.f32 0.0, %v363
    %v365 = vpop.f32.mrf.mxu0
    %v366 = vadd.f32 0.0, %v365
    %v367 = vpop.f32.mrf.mxu0
    %v368 = vpop.f32.mrf.mxu0
    %369 = vdwg.mxu0
    %v378 = vunpack.c.l.b16 %v131
    %v379 = vunpack.c.h.b16 %v131
    %v380 = vunpack.c.l.b16 %v132
    %v381 = vunpack.c.h.b16 %v132
    %v382 = vunpack.c.l.b16 %v133
    %v383 = vunpack.c.h.b16 %v133
    %v384 = vunpack.c.l.b16 %v134
    %v385 = vunpack.c.h.b16 %v134
    %v386 = vunpack.c.l.b16 %v135
    %v387 = vunpack.c.h.b16 %v135
    %v388 = vunpack.c.l.b16 %v136
    %v389 = vunpack.c.h.b16 %v136
    %v390 = vunpack.c.l.b16 %v137
    %v391 = vunpack.c.h.b16 %v137
    %v392 = vunpack.c.l.b16 %v138
    %v393 = vunpack.c.h.b16 %v138
    %v394 = vpack.c.b16 %v386, %v378
    %v395 = vpack.c.b16 %v387, %v379
    %v396 = vpack.c.b16 %v388, %v380
    %v397 = vpack.c.b16 %v389, %v381
    %v398 = vpack.c.b16 %v390, %v382
    %v399 = vpack.c.b16 %v391, %v383
    %v400 = vpack.c.b16 %v392, %v384
    %v401 = vpack.c.b16 %v393, %v385
    %vm402 = vcmask 97280
    %v404 = vsel %vm402, %v128, 0
    %vm406 = vcmask 1045504
    %v408 = vsel %vm406, %v394, 0
    %v411 = vsel %vm406, %v395, 0
    %v414 = vsel %vm406, %v396, 0
    %v417 = vsel %vm406, %v397, 0
    %v420 = vsel %vm406, %v398, 0
    %v423 = vsel %vm406, %v399, 0
    %v426 = vsel %vm406, %v400, 0
    %v429 = vsel %vm406, %v401, 0
    %431 = vmatprep.subr.bf16.mxu0 0
    %432 = vmatpush1.bf16.msra.mxu0 0
    %433 = vmatprep.subr.bf16.mxu0 0
    %434 = vmatpush1.bf16.msra.mxu0 0
    %435 = vmatprep.subr.bf16.mxu0 0
    %436 = vmatpush1.bf16.msra.mxu0 0
    %437 = vmatprep.subr.bf16.mxu0 0
    %438 = vmatpush1.bf16.msra.mxu0 0
    %439 = vmatprep.subr.bf16.mxu0 0
    %440 = vmatpush1.bf16.msra.mxu0 0
    %441 = vmatprep.subr.bf16.mxu0 0
    %442 = vmatpush1.bf16.msra.mxu0 0
    %443 = vmatprep.subr.bf16.mxu0 0
    %444 = vmatpush1.bf16.msra.mxu0 0
    %445 = vmatprep.subr.bf16.mxu0 %v411
    %446 = vmatpush1.bf16.msra.mxu0 %v408
    %447 = vmatprep.subr.bf16.mxu0 0
    %448 = vmatpush2.bf16.msra.mxu0 0
    %449 = vmatprep.subr.bf16.mxu0 0
    %450 = vmatpush2.bf16.msra.mxu0 0
    %451 = vmatprep.subr.bf16.mxu0 0
    %452 = vmatpush2.bf16.msra.mxu0 0
    %453 = vmatprep.subr.bf16.mxu0 0
    %454 = vmatpush2.bf16.msra.mxu0 0
    %455 = vmatprep.subr.bf16.mxu0 0
    %456 = vmatpush2.bf16.msra.mxu0 0
    %457 = vmatprep.subr.bf16.mxu0 0
    %458 = vmatpush2.bf16.msra.mxu0 0
    %459 = vmatprep.subr.bf16.mxu0 0
    %460 = vmatpush2.bf16.msra.mxu0 0
    %461 = vmatprep.subr.bf16.mxu0 0
    %462 = vmatpush2.bf16.msra.mxu0 0
    %463 = vmatprep.mubr.bf16.mxu0 0
    %464 = vmatmul.mubr.bf16.gmra.mxu0 %v404
    %v465 = vpop.f32.mrf.mxu0
    %v466 = vadd.f32 %v241, %v465
    %v467 = vpop.f32.mrf.mxu0
    %v468 = vadd.f32 %v243, %v467
    %v469 = vpop.f32.mrf.mxu0
    %v470 = vpop.f32.mrf.mxu0
    %471 = vdwg.mxu0
    %472 = vmatprep.subr.bf16.mxu0 0
    %473 = vmatpush1.bf16.msra.mxu0 0
    %474 = vmatprep.subr.bf16.mxu0 0
    %475 = vmatpush1.bf16.msra.mxu0 0
    %476 = vmatprep.subr.bf16.mxu0 0
    %477 = vmatpush1.bf16.msra.mxu0 0
    %478 = vmatprep.subr.bf16.mxu0 0
    %479 = vmatpush1.bf16.msra.mxu0 0
    %480 = vmatprep.subr.bf16.mxu0 0
    %481 = vmatpush1.bf16.msra.mxu0 0
    %482 = vmatprep.subr.bf16.mxu0 0
    %483 = vmatpush1.bf16.msra.mxu0 0
    %484 = vmatprep.subr.bf16.mxu0 0
    %485 = vmatpush1.bf16.msra.mxu0 0
    %486 = vmatprep.subr.bf16.mxu0 %v417
    %487 = vmatpush1.bf16.msra.mxu0 %v414
    %488 = vmatprep.subr.bf16.mxu0 0
    %489 = vmatpush2.bf16.msra.mxu0 0
    %490 = vmatprep.subr.bf16.mxu0 0
    %491 = vmatpush2.bf16.msra.mxu0 0
    %492 = vmatprep.subr.bf16.mxu0 0
    %493 = vmatpush2.bf16.msra.mxu0 0
    %494 = vmatprep.subr.bf16.mxu0 0
    %495 = vmatpush2.bf16.msra.mxu0 0
    %496 = vmatprep.subr.bf16.mxu0 0
    %497 = vmatpush2.bf16.msra.mxu0 0
    %498 = vmatprep.subr.bf16.mxu0 0
    %499 = vmatpush2.bf16.msra.mxu0 0
    %500 = vmatprep.subr.bf16.mxu0 0
    %501 = vmatpush2.bf16.msra.mxu0 0
    %502 = vmatprep.subr.bf16.mxu0 0
    %503 = vmatpush2.bf16.msra.mxu0 0
    %504 = vmatprep.mubr.bf16.mxu0 0
    %505 = vmatmul.mubr.bf16.gmra.mxu0 %v404
    %v506 = vpop.f32.mrf.mxu0
    %v507 = vadd.f32 %v282, %v506
    %v508 = vpop.f32.mrf.mxu0
    %v509 = vadd.f32 %v284, %v508
    %v510 = vpop.f32.mrf.mxu0
    %v511 = vpop.f32.mrf.mxu0
    %512 = vdwg.mxu0
    %513 = vmatprep.subr.bf16.mxu0 0
    %514 = vmatpush1.bf16.msra.mxu0 0
    %515 = vmatprep.subr.bf16.mxu0 0
    %516 = vmatpush1.bf16.msra.mxu0 0
    %517 = vmatprep.subr.bf16.mxu0 0
    %518 = vmatpush1.bf16.msra.mxu0 0
    %519 = vmatprep.subr.bf16.mxu0 0
    %520 = vmatpush1.bf16.msra.mxu0 0
    %521 = vmatprep.subr.bf16.mxu0 0
    %522 = vmatpush1.bf16.msra.mxu0 0
    %523 = vmatprep.subr.bf16.mxu0 0
    %524 = vmatpush1.bf16.msra.mxu0 0
    %525 = vmatprep.subr.bf16.mxu0 0
    %526 = vmatpush1.bf16.msra.mxu0 0
    %527 = vmatprep.subr.bf16.mxu0 %v423
    %528 = vmatpush1.bf16.msra.mxu0 %v420
    %529 = vmatprep.subr.bf16.mxu0 0
    %530 = vmatpush2.bf16.msra.mxu0 0
    %531 = vmatprep.subr.bf16.mxu0 0
    %532 = vmatpush2.bf16.msra.mxu0 0
    %533 = vmatprep.subr.bf16.mxu0 0
    %534 = vmatpush2.bf16.msra.mxu0 0
    %535 = vmatprep.subr.bf16.mxu0 0
    %536 = vmatpush2.bf16.msra.mxu0 0
    %537 = vmatprep.subr.bf16.mxu0 0
    %538 = vmatpush2.bf16.msra.mxu0 0
    %539 = vmatprep.subr.bf16.mxu0 0
    %540 = vmatpush2.bf16.msra.mxu0 0
    %541 = vmatprep.subr.bf16.mxu0 0
    %542 = vmatpush2.bf16.msra.mxu0 0
    %543 = vmatprep.subr.bf16.mxu0 0
    %544 = vmatpush2.bf16.msra.mxu0 0
    %545 = vmatprep.mubr.bf16.mxu0 0
    %546 = vmatmul.mubr.bf16.gmra.mxu0 %v404
    %v547 = vpop.f32.mrf.mxu0
    %v548 = vadd.f32 %v323, %v547
    %v549 = vpop.f32.mrf.mxu0
    %v550 = vadd.f32 %v325, %v549
    %v551 = vpop.f32.mrf.mxu0
    %v552 = vpop.f32.mrf.mxu0
    %553 = vdwg.mxu0
    %554 = vmatprep.subr.bf16.mxu0 0
    %555 = vmatpush1.bf16.msra.mxu0 0
    %556 = vmatprep.subr.bf16.mxu0 0
    %557 = vmatpush1.bf16.msra.mxu0 0
    %558 = vmatprep.subr.bf16.mxu0 0
    %559 = vmatpush1.bf16.msra.mxu0 0
    %560 = vmatprep.subr.bf16.mxu0 0
    %561 = vmatpush1.bf16.msra.mxu0 0
    %562 = vmatprep.subr.bf16.mxu0 0
    %563 = vmatpush1.bf16.msra.mxu0 0
    %564 = vmatprep.subr.bf16.mxu0 0
    %565 = vmatpush1.bf16.msra.mxu0 0
    %566 = vmatprep.subr.bf16.mxu0 0
    %567 = vmatpush1.bf16.msra.mxu0 0
    %568 = vmatprep.subr.bf16.mxu0 %v429
    %569 = vmatpush1.bf16.msra.mxu0 %v426
    %570 = vmatprep.subr.bf16.mxu0 0
    %571 = vmatpush2.bf16.msra.mxu0 0
    %572 = vmatprep.subr.bf16.mxu0 0
    %573 = vmatpush2.bf16.msra.mxu0 0
    %574 = vmatprep.subr.bf16.mxu0 0
    %575 = vmatpush2.bf16.msra.mxu0 0
    %576 = vmatprep.subr.bf16.mxu0 0
    %577 = vmatpush2.bf16.msra.mxu0 0
    %578 = vmatprep.subr.bf16.mxu0 0
    %579 = vmatpush2.bf16.msra.mxu0 0
    %580 = vmatprep.subr.bf16.mxu0 0
    %581 = vmatpush2.bf16.msra.mxu0 0
    %582 = vmatprep.subr.bf16.mxu0 0
    %583 = vmatpush2.bf16.msra.mxu0 0
    %584 = vmatprep.subr.bf16.mxu0 0
    %585 = vmatpush2.bf16.msra.mxu0 0
    %586 = vmatprep.mubr.bf16.mxu0 0
    %587 = vmatmul.mubr.bf16.gmra.mxu0 %v404
    %v588 = vpop.f32.mrf.mxu0
    %v589 = vadd.f32 %v364, %v588
    %v590 = vpop.f32.mrf.mxu0
    %v591 = vadd.f32 %v366, %v590
    %v592 = vpop.f32.mrf.mxu0
    %v593 = vpop.f32.mrf.mxu0
    %594 = vdwg.mxu0
    %v595 = vld [vmem:[#allocation6] sm:$0xff]
    %v597 = vlaneseq
    %v598 = vshrl.u32 %v597, 7
    %v599 = vsub.s32 0, %v598
    %v600 = vrot.slane %v595, %v599
    %v601 = vlaneseq
    %v602 = vshrl.u32 %v601, 7
    %v603 = vsub.s32 1, %v602
    %v604 = vrot.slane %v595, %v603
    %v605 = vlaneseq
    %v606 = vshrl.u32 %v605, 7
    %v607 = vsub.s32 2, %v606
    %v608 = vrot.slane %v595, %v607
    %v609 = vlaneseq
    %v610 = vshrl.u32 %v609, 7
    %v611 = vsub.s32 3, %v610
    %v612 = vrot.slane %v595, %v611
    %v613 = vlaneseq
    %v614 = vshrl.u32 %v613, 7
    %v615 = vsub.s32 4, %v614
    %v616 = vrot.slane %v595, %v615
    %v617 = vlaneseq
    %v618 = vshrl.u32 %v617, 7
    %v619 = vsub.s32 5, %v618
    %v620 = vrot.slane %v595, %v619
    %v621 = vlaneseq
    %v622 = vshrl.u32 %v621, 7
    %v623 = vsub.s32 6, %v622
    %v624 = vrot.slane %v595, %v623
    %v625 = vlaneseq
    %v626 = vshrl.u32 %v625, 7
    %v627 = vsub.s32 7, %v626
    %v628 = vrot.slane %v595, %v627
    %v637 = vadd.f32 %v466, %v600
    %v638 = vadd.f32 %v468, %v604
    %v639 = vadd.f32 %v507, %v608
    %v640 = vadd.f32 %v509, %v612
    %v641 = vadd.f32 %v548, %v616
    %v642 = vadd.f32 %v550, %v620
    %v643 = vadd.f32 %v589, %v624
    %v644 = vadd.f32 %v591, %v628
    %v645 = vmax.f32 %v637, 0.0
    %v646 = vmax.f32 %v638, 0.0
    %v647 = vmax.f32 %v639, 0.0
    %v648 = vmax.f32 %v640, 0.0
    %v649 = vmax.f32 %v641, 0.0
    %v650 = vmax.f32 %v642, 0.0
    %v651 = vmax.f32 %v643, 0.0
    %v652 = vmax.f32 %v644, 0.0
    %v653 = vpack.c.bf16 %v645, %v645
    %v654 = vpack.c.bf16 %v646, %v646
    %v655 = vpack.c.bf16 %v647, %v647
    %v656 = vpack.c.bf16 %v648, %v648
    %v657 = vpack.c.bf16 %v649, %v649
    %v658 = vpack.c.bf16 %v650, %v650
    %v659 = vpack.c.bf16 %v651, %v651
    %v660 = vpack.c.bf16 %v652, %v652
    %v661 = vld [vmem:[#allocation8] sm:$0xff]
    %v662 = vld [vmem:[#allocation8 + $0x8] sm:$0xf]
    %v663 = vld [vmem:[#allocation8 + $0xc] sm:$0xff]
    %v664 = vld [vmem:[#allocation8 + $0x14] sm:$0xf]
    %v665 = vld [vmem:[#allocation8 + $0x18] sm:$0xff]
    %v666 = vld [vmem:[#allocation8 + $0x20] sm:$0xf]
    %v667 = vld [vmem:[#allocation8 + $0x24] sm:$0xff]
    %v668 = vld [vmem:[#allocation8 + $0x2c] sm:$0xf]
    %v669 = vld [vmem:[#allocation8 + $0x30] sm:$0xff]
    %v670 = vld [vmem:[#allocation8 + $0x38] sm:$0xf]
    %v671 = vld [vmem:[#allocation8 + $0x3c] sm:$0xff]
    %v672 = vld [vmem:[#allocation8 + $0x44] sm:$0xf]
    %v673 = vld [vmem:[#allocation8 + $0x48] sm:$0xff]
    %v674 = vld [vmem:[#allocation8 + $0x50] sm:$0xf]
    %v675 = vld [vmem:[#allocation8 + $0x54] sm:$0xff]
    %v676 = vld [vmem:[#allocation8 + $0x5c] sm:$0xf]
    %v677 = vld [vmem:[#allocation8 + $0x60] sm:$0xff]
    %v678 = vld [vmem:[#allocation8 + $0x68] sm:$0xf]
    %v679 = vld [vmem:[#allocation8 + $0x6c] sm:$0xff]
    %v680 = vld [vmem:[#allocation8 + $0x74] sm:$0xf]
    %v681 = vld [vmem:[#allocation8 + $0x78] sm:$0xff]
    %v682 = vld [vmem:[#allocation8 + $0x80] sm:$0xf]
    %v683 = vld [vmem:[#allocation8 + $0x84] sm:$0xff]
    %v684 = vld [vmem:[#allocation8 + $0x8c] sm:$0xf]
    %v685 = vld [vmem:[#allocation8 + $0x90] sm:$0xff]
    %v686 = vld [vmem:[#allocation8 + $0x98] sm:$0xf]
    %v687 = vld [vmem:[#allocation8 + $0x9c] sm:$0xff]
    %v688 = vld [vmem:[#allocation8 + $0xa4] sm:$0xf]
    %v689 = vld [vmem:[#allocation8 + $0xa8] sm:$0xff]
    %v690 = vld [vmem:[#allocation8 + $0xb0] sm:$0xf]
    %v691 = vld [vmem:[#allocation8 + $0xb4] sm:$0xff]
    %v692 = vld [vmem:[#allocation8 + $0xbc] sm:$0xf]
    %v693 = vld [vmem:[#allocation8 + $0xc0] sm:$0xff]
    %v694 = vld [vmem:[#allocation8 + $0xc8] sm:$0xf]
    %v695 = vld [vmem:[#allocation8 + $0xcc] sm:$0xff]
    %v696 = vld [vmem:[#allocation8 + $0xd4] sm:$0xf]
    %v697 = vld [vmem:[#allocation8 + $0xd8] sm:$0xff]
    %v698 = vld [vmem:[#allocation8 + $0xe0] sm:$0xf]
    %v699 = vld [vmem:[#allocation8 + $0xe4] sm:$0xff]
    %v700 = vld [vmem:[#allocation8 + $0xec] sm:$0xf]
    %v701 = vld [vmem:[#allocation8 + $0xf0] sm:$0xff]
    %v702 = vld [vmem:[#allocation8 + $0xf8] sm:$0xf]
    %v703 = vld [vmem:[#allocation8 + $0xfc] sm:$0xff]
    %v704 = vld [vmem:[#allocation8 + $0x104] sm:$0xf]
    %v705 = vld [vmem:[#allocation8 + $0x108] sm:$0xff]
    %v706 = vld [vmem:[#allocation8 + $0x110] sm:$0xf]
    %v707 = vld [vmem:[#allocation8 + $0x114] sm:$0xff]
    %v708 = vld [vmem:[#allocation8 + $0x11c] sm:$0xf]
    %v709 = vld [vmem:[#allocation8 + $0x120] sm:$0xff]
    %v710 = vld [vmem:[#allocation8 + $0x128] sm:$0xf]
    %v711 = vld [vmem:[#allocation8 + $0x12c] sm:$0xff]
    %v712 = vld [vmem:[#allocation8 + $0x134] sm:$0xf]
    %v713 = vld [vmem:[#allocation8 + $0x138] sm:$0xff]
    %v714 = vld [vmem:[#allocation8 + $0x140] sm:$0xf]
    %v715 = vld [vmem:[#allocation8 + $0x144] sm:$0xff]
    %v716 = vld [vmem:[#allocation8 + $0x14c] sm:$0xf]
    %v717 = vld [vmem:[#allocation8 + $0x150] sm:$0xff]
    %v718 = vld [vmem:[#allocation8 + $0x158] sm:$0xf]
    %v719 = vld [vmem:[#allocation8 + $0x15c] sm:$0xff]
    %v720 = vld [vmem:[#allocation8 + $0x164] sm:$0xf]
    %v721 = vld [vmem:[#allocation8 + $0x168] sm:$0xff]
    %v722 = vld [vmem:[#allocation8 + $0x170] sm:$0xf]
    %v723 = vld [vmem:[#allocation8 + $0x174] sm:$0xff]
    %v724 = vld [vmem:[#allocation8 + $0x17c] sm:$0xf]
    %v725 = vld [vmem:[#allocation8 + $0x180] sm:$0xff]
    %v726 = vld [vmem:[#allocation8 + $0x188] sm:$0xf]
    %v727 = vld [vmem:[#allocation8 + $0x18c] sm:$0xff]
    %v728 = vld [vmem:[#allocation8 + $0x194] sm:$0xf]
    %v729 = vld [vmem:[#allocation8 + $0x198] sm:$0xff]
    %v730 = vld [vmem:[#allocation8 + $0x1a0] sm:$0xf]
    %v731 = vld [vmem:[#allocation8 + $0x1a4] sm:$0xff]
    %v732 = vld [vmem:[#allocation8 + $0x1ac] sm:$0xf]
    %v733 = vld [vmem:[#allocation8 + $0x1b0] sm:$0xff]
    %v734 = vld [vmem:[#allocation8 + $0x1b8] sm:$0xf]
    %v735 = vld [vmem:[#allocation8 + $0x1bc] sm:$0xff]
    %v736 = vld [vmem:[#allocation8 + $0x1c4] sm:$0xf]
    %v737 = vld [vmem:[#allocation8 + $0x1c8] sm:$0xff]
    %v738 = vld [vmem:[#allocation8 + $0x1d0] sm:$0xf]
    %v739 = vld [vmem:[#allocation8 + $0x1d4] sm:$0xff]
    %v740 = vld [vmem:[#allocation8 + $0x1dc] sm:$0xf]
    %v741 = vld [vmem:[#allocation8 + $0x1e0] sm:$0xff]
    %v742 = vld [vmem:[#allocation8 + $0x1e8] sm:$0xf]
    %v743 = vld [vmem:[#allocation8 + $0x1ec] sm:$0xff]
    %v744 = vld [vmem:[#allocation8 + $0x1f4] sm:$0xf]
    %v745 = vld [vmem:[#allocation8 + $0x1f8] sm:$0xff]
    %v746 = vld [vmem:[#allocation8 + $0x200] sm:$0xf]
    %v747 = vld [vmem:[#allocation8 + $0x204] sm:$0xff]
    %v748 = vld [vmem:[#allocation8 + $0x20c] sm:$0xf]
    %v749 = vld [vmem:[#allocation8 + $0x210] sm:$0xff]
    %v750 = vld [vmem:[#allocation8 + $0x218] sm:$0xf]
    %v751 = vld [vmem:[#allocation8 + $0x21c] sm:$0xff]
    %v752 = vld [vmem:[#allocation8 + $0x224] sm:$0xf]
    %v753 = vld [vmem:[#allocation8 + $0x228] sm:$0xff]
    %v754 = vld [vmem:[#allocation8 + $0x230] sm:$0xf]
    %v755 = vld [vmem:[#allocation8 + $0x234] sm:$0xff]
    %v756 = vld [vmem:[#allocation8 + $0x23c] sm:$0xf]
    %v757 = vld [vmem:[#allocation8 + $0x240] sm:$0xff]
    %v758 = vld [vmem:[#allocation8 + $0x248] sm:$0xf]
    %v759 = vld [vmem:[#allocation8 + $0x24c] sm:$0xff]
    %v760 = vld [vmem:[#allocation8 + $0x254] sm:$0xf]
    %v761 = vld [vmem:[#allocation8 + $0x258] sm:$0xff]
    %v762 = vld [vmem:[#allocation8 + $0x260] sm:$0xf]
    %v763 = vld [vmem:[#allocation8 + $0x264] sm:$0xff]
    %v764 = vld [vmem:[#allocation8 + $0x26c] sm:$0xf]
    %v765 = vld [vmem:[#allocation8 + $0x270] sm:$0xff]
    %v766 = vld [vmem:[#allocation8 + $0x278] sm:$0xf]
    %v767 = vld [vmem:[#allocation8 + $0x27c] sm:$0xff]
    %v768 = vld [vmem:[#allocation8 + $0x284] sm:$0xf]
    %v769 = vld [vmem:[#allocation8 + $0x288] sm:$0xff]
    %v770 = vld [vmem:[#allocation8 + $0x290] sm:$0xf]
    %v771 = vld [vmem:[#allocation8 + $0x294] sm:$0xff]
    %v772 = vld [vmem:[#allocation8 + $0x29c] sm:$0xf]
    %v773 = vld [vmem:[#allocation8 + $0x2a0] sm:$0xff]
    %v774 = vld [vmem:[#allocation8 + $0x2a8] sm:$0xf]
    %v775 = vld [vmem:[#allocation8 + $0x2ac] sm:$0xff]
    %v776 = vld [vmem:[#allocation8 + $0x2b4] sm:$0xf]
    %v777 = vld [vmem:[#allocation8 + $0x2b8] sm:$0xff]
    %v778 = vld [vmem:[#allocation8 + $0x2c0] sm:$0xf]
    %v779 = vld [vmem:[#allocation8 + $0x2c4] sm:$0xff]
    %v780 = vld [vmem:[#allocation8 + $0x2cc] sm:$0xf]
    %v781 = vld [vmem:[#allocation8 + $0x2d0] sm:$0xff]
    %v782 = vld [vmem:[#allocation8 + $0x2d8] sm:$0xf]
    %v783 = vld [vmem:[#allocation8 + $0x2dc] sm:$0xff]
    %v784 = vld [vmem:[#allocation8 + $0x2e4] sm:$0xf]
    %v785 = vld [vmem:[#allocation8 + $0x2e8] sm:$0xff]
    %v786 = vld [vmem:[#allocation8 + $0x2f0] sm:$0xf]
    %v787 = vld [vmem:[#allocation8 + $0x2f4] sm:$0xff]
    %v788 = vld [vmem:[#allocation8 + $0x2fc] sm:$0xf]
    %v789 = vld [vmem:[#allocation9] sm:$0x7]
    %v791 = vlaneseq
    %v792 = vshrl.u32 %v791, 7
    %v793 = vsub.s32 0, %v792
    %v794 = vrot.slane %v789, %v793
    %v795 = vlaneseq
    %v796 = vshrl.u32 %v795, 7
    %v797 = vsub.s32 1, %v796
    %v798 = vrot.slane %v789, %v797
    %v799 = vlaneseq
    %v800 = vshrl.u32 %v799, 7
    %v801 = vsub.s32 2, %v800
    %v802 = vrot.slane %v789, %v801
    %v934 = vunpack.c.l.b16 %v661
    %v935 = vunpack.c.h.b16 %v661
    %v936 = vunpack.c.l.b16 %v662
    %v937 = vunpack.c.l.b16 %v663
    %v938 = vunpack.c.h.b16 %v663
    %v939 = vunpack.c.l.b16 %v664
    %v940 = vunpack.c.l.b16 %v665
    %v941 = vunpack.c.h.b16 %v665
    %v942 = vunpack.c.l.b16 %v666
    %v943 = vunpack.c.l.b16 %v667
    %v944 = vunpack.c.h.b16 %v667
    %v945 = vunpack.c.l.b16 %v668
    %v946 = vunpack.c.l.b16 %v669
    %v947 = vunpack.c.h.b16 %v669
    %v948 = vunpack.c.l.b16 %v670
    %v949 = vunpack.c.l.b16 %v671
    %v950 = vunpack.c.h.b16 %v671
    %v951 = vunpack.c.l.b16 %v672
    %v952 = vunpack.c.l.b16 %v673
    %v953 = vunpack.c.h.b16 %v673
    %v954 = vunpack.c.l.b16 %v674
    %v955 = vunpack.c.l.b16 %v675
    %v956 = vunpack.c.h.b16 %v675
    %v957 = vunpack.c.l.b16 %v676
    %v958 = vunpack.c.l.b16 %v677
    %v959 = vunpack.c.h.b16 %v677
    %v960 = vunpack.c.l.b16 %v678
    %v961 = vunpack.c.l.b16 %v679
    %v962 = vunpack.c.h.b16 %v679
    %v963 = vunpack.c.l.b16 %v680
    %v964 = vunpack.c.l.b16 %v681
    %v965 = vunpack.c.h.b16 %v681
    %v966 = vunpack.c.l.b16 %v682
    %v967 = vunpack.c.l.b16 %v683
    %v968 = vunpack.c.h.b16 %v683
    %v969 = vunpack.c.l.b16 %v684
    %v970 = vunpack.c.l.b16 %v685
    %v971 = vunpack.c.h.b16 %v685
    %v972 = vunpack.c.l.b16 %v686
    %v973 = vunpack.c.l.b16 %v687
    %v974 = vunpack.c.h.b16 %v687
    %v975 = vunpack.c.l.b16 %v688
    %v976 = vunpack.c.l.b16 %v689
    %v977 = vunpack.c.h.b16 %v689
    %v978 = vunpack.c.l.b16 %v690
    %v979 = vunpack.c.l.b16 %v691
    %v980 = vunpack.c.h.b16 %v691
    %v981 = vunpack.c.l.b16 %v692
    %v982 = vunpack.c.l.b16 %v693
    %v983 = vunpack.c.h.b16 %v693
    %v984 = vunpack.c.l.b16 %v694
    %v985 = vunpack.c.l.b16 %v695
    %v986 = vunpack.c.h.b16 %v695
    %v987 = vunpack.c.l.b16 %v696
    %v988 = vunpack.c.l.b16 %v697
    %v989 = vunpack.c.h.b16 %v697
    %v990 = vunpack.c.l.b16 %v698
    %v991 = vunpack.c.l.b16 %v699
    %v992 = vunpack.c.h.b16 %v699
    %v993 = vunpack.c.l.b16 %v700
    %v994 = vunpack.c.l.b16 %v701
    %v995 = vunpack.c.h.b16 %v701
    %v996 = vunpack.c.l.b16 %v702
    %v997 = vunpack.c.l.b16 %v703
    %v998 = vunpack.c.h.b16 %v703
    %v999 = vunpack.c.l.b16 %v704
    %v1000 = vunpack.c.l.b16 %v705
    %v1001 = vunpack.c.h.b16 %v705
    %v1002 = vunpack.c.l.b16 %v706
    %v1003 = vunpack.c.l.b16 %v707
    %v1004 = vunpack.c.h.b16 %v707
    %v1005 = vunpack.c.l.b16 %v708
    %v1006 = vunpack.c.l.b16 %v709
    %v1007 = vunpack.c.h.b16 %v709
    %v1008 = vunpack.c.l.b16 %v710
    %v1009 = vunpack.c.l.b16 %v711
    %v1010 = vunpack.c.h.b16 %v711
    %v1011 = vunpack.c.l.b16 %v712
    %v1012 = vunpack.c.l.b16 %v713
    %v1013 = vunpack.c.h.b16 %v713
    %v1014 = vunpack.c.l.b16 %v714
    %v1015 = vunpack.c.l.b16 %v715
    %v1016 = vunpack.c.h.b16 %v715
    %v1017 = vunpack.c.l.b16 %v716
    %v1018 = vunpack.c.l.b16 %v717
    %v1019 = vunpack.c.h.b16 %v717
    %v1020 = vunpack.c.l.b16 %v718
    %v1021 = vunpack.c.l.b16 %v719
    %v1022 = vunpack.c.h.b16 %v719
    %v1023 = vunpack.c.l.b16 %v720
    %v1024 = vunpack.c.l.b16 %v721
    %v1025 = vunpack.c.h.b16 %v721
    %v1026 = vunpack.c.l.b16 %v722
    %v1027 = vunpack.c.l.b16 %v723
    %v1028 = vunpack.c.h.b16 %v723
    %v1029 = vunpack.c.l.b16 %v724
    %v1030 = vunpack.c.l.b16 %v725
    %v1031 = vunpack.c.h.b16 %v725
    %v1032 = vunpack.c.l.b16 %v726
    %v1033 = vunpack.c.l.b16 %v727
    %v1034 = vunpack.c.h.b16 %v727
    %v1035 = vunpack.c.l.b16 %v728
    %v1036 = vunpack.c.l.b16 %v729
    %v1037 = vunpack.c.h.b16 %v729
    %v1038 = vunpack.c.l.b16 %v730
    %v1039 = vunpack.c.l.b16 %v731
    %v1040 = vunpack.c.h.b16 %v731
    %v1041 = vunpack.c.l.b16 %v732
    %v1042 = vunpack.c.l.b16 %v733
    %v1043 = vunpack.c.h.b16 %v733
    %v1044 = vunpack.c.l.b16 %v734
    %v1045 = vunpack.c.l.b16 %v735
    %v1046 = vunpack.c.h.b16 %v735
    %v1047 = vunpack.c.l.b16 %v736
    %v1048 = vunpack.c.l.b16 %v737
    %v1049 = vunpack.c.h.b16 %v737
    %v1050 = vunpack.c.l.b16 %v738
    %v1051 = vunpack.c.l.b16 %v739
    %v1052 = vunpack.c.h.b16 %v739
    %v1053 = vunpack.c.l.b16 %v740
    %v1054 = vunpack.c.l.b16 %v741
    %v1055 = vunpack.c.h.b16 %v741
    %v1056 = vunpack.c.l.b16 %v742
    %v1057 = vunpack.c.l.b16 %v743
    %v1058 = vunpack.c.h.b16 %v743
    %v1059 = vunpack.c.l.b16 %v744
    %v1060 = vunpack.c.l.b16 %v745
    %v1061 = vunpack.c.h.b16 %v745
    %v1062 = vunpack.c.l.b16 %v746
    %v1063 = vunpack.c.l.b16 %v747
    %v1064 = vunpack.c.h.b16 %v747
    %v1065 = vunpack.c.l.b16 %v748
    %v1066 = vunpack.c.l.b16 %v749
    %v1067 = vunpack.c.h.b16 %v749
    %v1068 = vunpack.c.l.b16 %v750
    %v1069 = vunpack.c.l.b16 %v751
    %v1070 = vunpack.c.h.b16 %v751
    %v1071 = vunpack.c.l.b16 %v752
    %v1072 = vunpack.c.l.b16 %v753
    %v1073 = vunpack.c.h.b16 %v753
    %v1074 = vunpack.c.l.b16 %v754
    %v1075 = vunpack.c.l.b16 %v755
    %v1076 = vunpack.c.h.b16 %v755
    %v1077 = vunpack.c.l.b16 %v756
    %v1078 = vunpack.c.l.b16 %v757
    %v1079 = vunpack.c.h.b16 %v757
    %v1080 = vunpack.c.l.b16 %v758
    %v1081 = vunpack.c.l.b16 %v759
    %v1082 = vunpack.c.h.b16 %v759
    %v1083 = vunpack.c.l.b16 %v760
    %v1084 = vunpack.c.l.b16 %v761
    %v1085 = vunpack.c.h.b16 %v761
    %v1086 = vunpack.c.l.b16 %v762
    %v1087 = vunpack.c.l.b16 %v763
    %v1088 = vunpack.c.h.b16 %v763
    %v1089 = vunpack.c.l.b16 %v764
    %v1090 = vunpack.c.l.b16 %v765
    %v1091 = vunpack.c.h.b16 %v765
    %v1092 = vunpack.c.l.b16 %v766
    %v1093 = vunpack.c.l.b16 %v767
    %v1094 = vunpack.c.h.b16 %v767
    %v1095 = vunpack.c.l.b16 %v768
    %v1096 = vunpack.c.l.b16 %v769
    %v1097 = vunpack.c.h.b16 %v769
    %v1098 = vunpack.c.l.b16 %v770
    %v1099 = vunpack.c.l.b16 %v771
    %v1100 = vunpack.c.h.b16 %v771
    %v1101 = vunpack.c.l.b16 %v772
    %v1102 = vunpack.c.l.b16 %v773
    %v1103 = vunpack.c.h.b16 %v773
    %v1104 = vunpack.c.l.b16 %v774
    %v1105 = vunpack.c.l.b16 %v775
    %v1106 = vunpack.c.h.b16 %v775
    %v1107 = vunpack.c.l.b16 %v776
    %v1108 = vunpack.c.l.b16 %v777
    %v1109 = vunpack.c.h.b16 %v777
    %v1110 = vunpack.c.l.b16 %v778
    %v1111 = vunpack.c.l.b16 %v779
    %v1112 = vunpack.c.h.b16 %v779
    %v1113 = vunpack.c.l.b16 %v780
    %v1114 = vunpack.c.l.b16 %v781
    %v1115 = vunpack.c.h.b16 %v781
    %v1116 = vunpack.c.l.b16 %v782
    %v1117 = vunpack.c.l.b16 %v783
    %v1118 = vunpack.c.h.b16 %v783
    %v1119 = vunpack.c.l.b16 %v784
    %v1120 = vunpack.c.l.b16 %v785
    %v1121 = vunpack.c.h.b16 %v785
    %v1122 = vunpack.c.l.b16 %v786
    %v1123 = vunpack.c.l.b16 %v787
    %v1124 = vunpack.c.h.b16 %v787
    %v1125 = vunpack.c.l.b16 %v788
    %v1126 = vpack.c.b16 %v937, %v934
    %v1127 = vpack.c.b16 %v938, %v935
    %v1128 = vpack.c.b16 %v939, %v936
    %v1129 = vpack.c.b16 %v943, %v940
    %v1130 = vpack.c.b16 %v944, %v941
    %v1131 = vpack.c.b16 %v945, %v942
    %v1132 = vpack.c.b16 %v949, %v946
    %v1133 = vpack.c.b16 %v950, %v947
    %v1134 = vpack.c.b16 %v951, %v948
    %v1135 = vpack.c.b16 %v955, %v952
    %v1136 = vpack.c.b16 %v956, %v953
    %v1137 = vpack.c.b16 %v957, %v954
    %v1138 = vpack.c.b16 %v961, %v958
    %v1139 = vpack.c.b16 %v962, %v959
    %v1140 = vpack.c.b16 %v963, %v960
    %v1141 = vpack.c.b16 %v967, %v964
    %v1142 = vpack.c.b16 %v968, %v965
    %v1143 = vpack.c.b16 %v969, %v966
    %v1144 = vpack.c.b16 %v973, %v970
    %v1145 = vpack.c.b16 %v974, %v971
    %v1146 = vpack.c.b16 %v975, %v972
    %v1147 = vpack.c.b16 %v979, %v976
    %v1148 = vpack.c.b16 %v980, %v977
    %v1149 = vpack.c.b16 %v981, %v978
    %v1150 = vpack.c.b16 %v985, %v982
    %v1151 = vpack.c.b16 %v986, %v983
    %v1152 = vpack.c.b16 %v987, %v984
    %v1153 = vpack.c.b16 %v991, %v988
    %v1154 = vpack.c.b16 %v992, %v989
    %v1155 = vpack.c.b16 %v993, %v990
    %v1156 = vpack.c.b16 %v997, %v994
    %v1157 = vpack.c.b16 %v998, %v995
    %v1158 = vpack.c.b16 %v999, %v996
    %v1159 = vpack.c.b16 %v1003, %v1000
    %v1160 = vpack.c.b16 %v1004, %v1001
    %v1161 = vpack.c.b16 %v1005, %v1002
    %v1162 = vpack.c.b16 %v1009, %v1006
    %v1163 = vpack.c.b16 %v1010, %v1007
    %v1164 = vpack.c.b16 %v1011, %v1008
    %v1165 = vpack.c.b16 %v1015, %v1012
    %v1166 = vpack.c.b16 %v1016, %v1013
    %v1167 = vpack.c.b16 %v1017, %v1014
    %v1168 = vpack.c.b16 %v1021, %v1018
    %v1169 = vpack.c.b16 %v1022, %v1019
    %v1170 = vpack.c.b16 %v1023, %v1020
    %v1171 = vpack.c.b16 %v1027, %v1024
    %v1172 = vpack.c.b16 %v1028, %v1025
    %v1173 = vpack.c.b16 %v1029, %v1026
    %v1174 = vpack.c.b16 %v1033, %v1030
    %v1175 = vpack.c.b16 %v1034, %v1031
    %v1176 = vpack.c.b16 %v1035, %v1032
    %v1177 = vpack.c.b16 %v1039, %v1036
    %v1178 = vpack.c.b16 %v1040, %v1037
    %v1179 = vpack.c.b16 %v1041, %v1038
    %v1180 = vpack.c.b16 %v1045, %v1042
    %v1181 = vpack.c.b16 %v1046, %v1043
    %v1182 = vpack.c.b16 %v1047, %v1044
    %v1183 = vpack.c.b16 %v1051, %v1048
    %v1184 = vpack.c.b16 %v1052, %v1049
    %v1185 = vpack.c.b16 %v1053, %v1050
    %v1186 = vpack.c.b16 %v1057, %v1054
    %v1187 = vpack.c.b16 %v1058, %v1055
    %v1188 = vpack.c.b16 %v1059, %v1056
    %v1189 = vpack.c.b16 %v1063, %v1060
    %v1190 = vpack.c.b16 %v1064, %v1061
    %v1191 = vpack.c.b16 %v1065, %v1062
    %v1192 = vpack.c.b16 %v1069, %v1066
    %v1193 = vpack.c.b16 %v1070, %v1067
    %v1194 = vpack.c.b16 %v1071, %v1068
    %v1195 = vpack.c.b16 %v1075, %v1072
    %v1196 = vpack.c.b16 %v1076, %v1073
    %v1197 = vpack.c.b16 %v1077, %v1074
    %v1198 = vpack.c.b16 %v1081, %v1078
    %v1199 = vpack.c.b16 %v1082, %v1079
    %v1200 = vpack.c.b16 %v1083, %v1080
    %v1201 = vpack.c.b16 %v1087, %v1084
    %v1202 = vpack.c.b16 %v1088, %v1085
    %v1203 = vpack.c.b16 %v1089, %v1086
    %v1204 = vpack.c.b16 %v1093, %v1090
    %v1205 = vpack.c.b16 %v1094, %v1091
    %v1206 = vpack.c.b16 %v1095, %v1092
    %v1207 = vpack.c.b16 %v1099, %v1096
    %v1208 = vpack.c.b16 %v1100, %v1097
    %v1209 = vpack.c.b16 %v1101, %v1098
    %v1210 = vpack.c.b16 %v1105, %v1102
    %v1211 = vpack.c.b16 %v1106, %v1103
    %v1212 = vpack.c.b16 %v1107, %v1104
    %v1213 = vpack.c.b16 %v1111, %v1108
    %v1214 = vpack.c.b16 %v1112, %v1109
    %v1215 = vpack.c.b16 %v1113, %v1110
    %v1216 = vpack.c.b16 %v1117, %v1114
    %v1217 = vpack.c.b16 %v1118, %v1115
    %v1218 = vpack.c.b16 %v1119, %v1116
    %v1219 = vpack.c.b16 %v1123, %v1120
    %v1220 = vpack.c.b16 %v1124, %v1121
    %v1221 = vpack.c.b16 %v1125, %v1122
    %1318 = vmatprep.subr.bf16.mxu0 %v1148
    %1319 = vmatpush1.bf16.msra.mxu0 %v1147
    %1320 = vmatprep.subr.bf16.mxu0 %v1145
    %1321 = vmatpush1.bf16.msra.mxu0 %v1144
    %1322 = vmatprep.subr.bf16.mxu0 %v1142
    %1323 = vmatpush1.bf16.msra.mxu0 %v1141
    %1324 = vmatprep.subr.bf16.mxu0 %v1139
    %1325 = vmatpush1.bf16.msra.mxu0 %v1138
    %1326 = vmatprep.subr.bf16.mxu0 %v1136
    %1327 = vmatpush1.bf16.msra.mxu0 %v1135
    %1328 = vmatprep.subr.bf16.mxu0 %v1133
    %1329 = vmatpush1.bf16.msra.mxu0 %v1132
    %1330 = vmatprep.subr.bf16.mxu0 %v1130
    %1331 = vmatpush1.bf16.msra.mxu0 %v1129
    %1332 = vmatprep.subr.bf16.mxu0 %v1127
    %1333 = vmatpush1.bf16.msra.mxu0 %v1126
    %1334 = vmatprep.subr.bf16.mxu0 %v1172
    %1335 = vmatpush2.bf16.msra.mxu0 %v1171
    %1336 = vmatprep.subr.bf16.mxu0 %v1169
    %1337 = vmatpush2.bf16.msra.mxu0 %v1168
    %1338 = vmatprep.subr.bf16.mxu0 %v1166
    %1339 = vmatpush2.bf16.msra.mxu0 %v1165
    %1340 = vmatprep.subr.bf16.mxu0 %v1163
    %1341 = vmatpush2.bf16.msra.mxu0 %v1162
    %1342 = vmatprep.subr.bf16.mxu0 %v1160
    %1343 = vmatpush2.bf16.msra.mxu0 %v1159
    %1344 = vmatprep.subr.bf16.mxu0 %v1157
    %1345 = vmatpush2.bf16.msra.mxu0 %v1156
    %1346 = vmatprep.subr.bf16.mxu0 %v1154
    %1347 = vmatpush2.bf16.msra.mxu0 %v1153
    %1348 = vmatprep.subr.bf16.mxu0 %v1151
    %1349 = vmatpush2.bf16.msra.mxu0 %v1150
    %1350 = vmatprep.mubr.bf16.mxu0 %v654
    %1351 = vmatmul.mubr.bf16.gmra.mxu0 %v653
    %v1352 = vpop.f32.mrf.mxu0
    %v1353 = vadd.f32 %v794, %v1352
    %v1354 = vpop.f32.mrf.mxu0
    %v1355 = vadd.f32 %v798, %v1354
    %v1356 = vpop.f32.mrf.mxu0
    %v1357 = vpop.f32.mrf.mxu0
    %1358 = vdwg.mxu0
    %1359 = vmatprep.subr.bf16.mxu0 %v1196
    %1360 = vmatpush1.bf16.msra.mxu0 %v1195
    %1361 = vmatprep.subr.bf16.mxu0 %v1193
    %1362 = vmatpush1.bf16.msra.mxu0 %v1192
    %1363 = vmatprep.subr.bf16.mxu0 %v1190
    %1364 = vmatpush1.bf16.msra.mxu0 %v1189
    %1365 = vmatprep.subr.bf16.mxu0 %v1187
    %1366 = vmatpush1.bf16.msra.mxu0 %v1186
    %1367 = vmatprep.subr.bf16.mxu0 %v1184
    %1368 = vmatpush1.bf16.msra.mxu0 %v1183
    %1369 = vmatprep.subr.bf16.mxu0 %v1181
    %1370 = vmatpush1.bf16.msra.mxu0 %v1180
    %1371 = vmatprep.subr.bf16.mxu0 %v1178
    %1372 = vmatpush1.bf16.msra.mxu0 %v1177
    %1373 = vmatprep.subr.bf16.mxu0 %v1175
    %1374 = vmatpush1.bf16.msra.mxu0 %v1174
    %1375 = vmatprep.subr.bf16.mxu0 %v1220
    %1376 = vmatpush2.bf16.msra.mxu0 %v1219
    %1377 = vmatprep.subr.bf16.mxu0 %v1217
    %1378 = vmatpush2.bf16.msra.mxu0 %v1216
    %1379 = vmatprep.subr.bf16.mxu0 %v1214
    %1380 = vmatpush2.bf16.msra.mxu0 %v1213
    %1381 = vmatprep.subr.bf16.mxu0 %v1211
    %1382 = vmatpush2.bf16.msra.mxu0 %v1210
    %1383 = vmatprep.subr.bf16.mxu0 %v1208
    %1384 = vmatpush2.bf16.msra.mxu0 %v1207
    %1385 = vmatprep.subr.bf16.mxu0 %v1205
    %1386 = vmatpush2.bf16.msra.mxu0 %v1204
    %1387 = vmatprep.subr.bf16.mxu0 %v1202
    %1388 = vmatpush2.bf16.msra.mxu0 %v1201
    %1389 = vmatprep.subr.bf16.mxu0 %v1199
    %1390 = vmatpush2.bf16.msra.mxu0 %v1198
    %1391 = vmatprep.mubr.bf16.mxu0 %v656
    %1392 = vmatmul.mubr.bf16.gmra.mxu0 %v655
    %v1393 = vpop.f32.mrf.mxu0
    %v1394 = vadd.f32 %v1353, %v1393
    %v1395 = vpop.f32.mrf.mxu0
    %v1396 = vadd.f32 %v1355, %v1395
    %v1397 = vpop.f32.mrf.mxu0
    %v1398 = vpop.f32.mrf.mxu0
    %1399 = vdwg.mxu0
    %1400 = vmatprep.subr.bf16.mxu0 0
    %1401 = vmatpush1.bf16.msra.mxu0 %v1149
    %1402 = vmatprep.subr.bf16.mxu0 0
    %1403 = vmatpush1.bf16.msra.mxu0 %v1146
    %1404 = vmatprep.subr.bf16.mxu0 0
    %1405 = vmatpush1.bf16.msra.mxu0 %v1143
    %1406 = vmatprep.subr.bf16.mxu0 0
    %1407 = vmatpush1.bf16.msra.mxu0 %v1140
    %1408 = vmatprep.subr.bf16.mxu0 0
    %1409 = vmatpush1.bf16.msra.mxu0 %v1137
    %1410 = vmatprep.subr.bf16.mxu0 0
    %1411 = vmatpush1.bf16.msra.mxu0 %v1134
    %1412 = vmatprep.subr.bf16.mxu0 0
    %1413 = vmatpush1.bf16.msra.mxu0 %v1131
    %1414 = vmatprep.subr.bf16.mxu0 0
    %1415 = vmatpush1.bf16.msra.mxu0 %v1128
    %1416 = vmatprep.subr.bf16.mxu0 0
    %1417 = vmatpush2.bf16.msra.mxu0 %v1173
    %1418 = vmatprep.subr.bf16.mxu0 0
    %1419 = vmatpush2.bf16.msra.mxu0 %v1170
    %1420 = vmatprep.subr.bf16.mxu0 0
    %1421 = vmatpush2.bf16.msra.mxu0 %v1167
    %1422 = vmatprep.subr.bf16.mxu0 0
    %1423 = vmatpush2.bf16.msra.mxu0 %v1164
    %1424 = vmatprep.subr.bf16.mxu0 0
    %1425 = vmatpush2.bf16.msra.mxu0 %v1161
    %1426 = vmatprep.subr.bf16.mxu0 0
    %1427 = vmatpush2.bf16.msra.mxu0 %v1158
    %1428 = vmatprep.subr.bf16.mxu0 0
    %1429 = vmatpush2.bf16.msra.mxu0 %v1155
    %1430 = vmatprep.subr.bf16.mxu0 0
    %1431 = vmatpush2.bf16.msra.mxu0 %v1152
    %1432 = vmatprep.mubr.bf16.mxu0 %v654
    %1433 = vmatmul.mubr.bf16.gmra.mxu0 %v653
    %v1434 = vpop.f32.mrf.mxu0
    %v1435 = vadd.f32 %v802, %v1434
    %v1436 = vpop.f32.mrf.mxu0
    %v1437 = vpop.f32.mrf.mxu0
    %v1438 = vpop.f32.mrf.mxu0
    %1439 = vdwg.mxu0
    %1440 = vmatprep.subr.bf16.mxu0 0
    %1441 = vmatpush1.bf16.msra.mxu0 %v1197
    %1442 = vmatprep.subr.bf16.mxu0 0
    %1443 = vmatpush1.bf16.msra.mxu0 %v1194
    %1444 = vmatprep.subr.bf16.mxu0 0
    %1445 = vmatpush1.bf16.msra.mxu0 %v1191
    %1446 = vmatprep.subr.bf16.mxu0 0
    %1447 = vmatpush1.bf16.msra.mxu0 %v1188
    %1448 = vmatprep.subr.bf16.mxu0 0
    %1449 = vmatpush1.bf16.msra.mxu0 %v1185
    %1450 = vmatprep.subr.bf16.mxu0 0
    %1451 = vmatpush1.bf16.msra.mxu0 %v1182
    %1452 = vmatprep.subr.bf16.mxu0 0
    %1453 = vmatpush1.bf16.msra.mxu0 %v1179
    %1454 = vmatprep.subr.bf16.mxu0 0
    %1455 = vmatpush1.bf16.msra.mxu0 %v1176
    %1456 = vmatprep.subr.bf16.mxu0 0
    %1457 = vmatpush2.bf16.msra.mxu0 %v1221
    %1458 = vmatprep.subr.bf16.mxu0 0
    %1459 = vmatpush2.bf16.msra.mxu0 %v1218
    %1460 = vmatprep.subr.bf16.mxu0 0
    %1461 = vmatpush2.bf16.msra.mxu0 %v1215
    %1462 = vmatprep.subr.bf16.mxu0 0
    %1463 = vmatpush2.bf16.msra.mxu0 %v1212
    %1464 = vmatprep.subr.bf16.mxu0 0
    %1465 = vmatpush2.bf16.msra.mxu0 %v1209
    %1466 = vmatprep.subr.bf16.mxu0 0
    %1467 = vmatpush2.bf16.msra.mxu0 %v1206
    %1468 = vmatprep.subr.bf16.mxu0 0
    %1469 = vmatpush2.bf16.msra.mxu0 %v1203
    %1470 = vmatprep.subr.bf16.mxu0 0
    %1471 = vmatpush2.bf16.msra.mxu0 %v1200
    %1472 = vmatprep.mubr.bf16.mxu0 %v656
    %1473 = vmatmul.mubr.bf16.gmra.mxu0 %v655
    %v1474 = vpop.f32.mrf.mxu0
    %v1475 = vadd.f32 %v1435, %v1474
    %v1476 = vpop.f32.mrf.mxu0
    %v1477 = vpop.f32.mrf.mxu0
    %v1478 = vpop.f32.mrf.mxu0
    %1479 = vdwg.mxu0
    %v1480 = vmax.f32 %v1394, 0.0
    %v1481 = vmax.f32 %v1396, 0.0
    %v1482 = vmax.f32 %v1475, 0.0
    %v1483 = vld [vmem:[#allocation11] sm:$0xff]
    %v1484 = vld [vmem:[#allocation11 + $0x8] sm:$0xf]
    %v1485 = vld [vmem:[#allocation11 + $0xc] sm:$0xff]
    %v1486 = vld [vmem:[#allocation11 + $0x14] sm:$0xf]
    %v1487 = vld [vmem:[#allocation11 + $0x18] sm:$0xff]
    %v1488 = vld [vmem:[#allocation11 + $0x20] sm:$0xf]
    %v1489 = vld [vmem:[#allocation11 + $0x24] sm:$0xff]
    %v1490 = vld [vmem:[#allocation11 + $0x2c] sm:$0xf]
    %v1491 = vld [vmem:[#allocation11 + $0x30] sm:$0xff]
    %v1492 = vld [vmem:[#allocation11 + $0x38] sm:$0xf]
    %v1493 = vld [vmem:[#allocation11 + $0x3c] sm:$0xff]
    %v1494 = vld [vmem:[#allocation11 + $0x44] sm:$0xf]
    %v1495 = vld [vmem:[#allocation11 + $0x48] sm:$0xff]
    %v1496 = vld [vmem:[#allocation11 + $0x50] sm:$0xf]
    %v1497 = vld [vmem:[#allocation11 + $0x54] sm:$0xff]
    %v1498 = vld [vmem:[#allocation11 + $0x5c] sm:$0xf]
    %v1499 = vld [vmem:[#allocation11 + $0x60] sm:$0xff]
    %v1500 = vld [vmem:[#allocation11 + $0x68] sm:$0xf]
    %v1501 = vld [vmem:[#allocation11 + $0x6c] sm:$0xff]
    %v1502 = vld [vmem:[#allocation11 + $0x74] sm:$0xf]
    %v1503 = vld [vmem:[#allocation11 + $0x78] sm:$0xff]
    %v1504 = vld [vmem:[#allocation11 + $0x80] sm:$0xf]
    %v1505 = vld [vmem:[#allocation11 + $0x84] sm:$0xff]
    %v1506 = vld [vmem:[#allocation11 + $0x8c] sm:$0xf]
    %v1507 = vld [vmem:[#allocation11 + $0x90] sm:$0xff]
    %v1508 = vld [vmem:[#allocation11 + $0x98] sm:$0xf]
    %v1509 = vld [vmem:[#allocation11 + $0x9c] sm:$0xff]
    %v1510 = vld [vmem:[#allocation11 + $0xa4] sm:$0xf]
    %v1511 = vld [vmem:[#allocation11 + $0xa8] sm:$0xff]
    %v1512 = vld [vmem:[#allocation11 + $0xb0] sm:$0xf]
    %v1513 = vld [vmem:[#allocation11 + $0xb4] sm:$0xff]
    %v1514 = vld [vmem:[#allocation11 + $0xbc] sm:$0xf]
    %v1515 = vld [vmem:[#allocation11 + $0xc0] sm:$0xff]
    %v1516 = vld [vmem:[#allocation11 + $0xc8] sm:$0xf]
    %v1517 = vld [vmem:[#allocation11 + $0xcc] sm:$0xff]
    %v1518 = vld [vmem:[#allocation11 + $0xd4] sm:$0xf]
    %v1519 = vld [vmem:[#allocation11 + $0xd8] sm:$0xff]
    %v1520 = vld [vmem:[#allocation11 + $0xe0] sm:$0xf]
    %v1521 = vld [vmem:[#allocation11 + $0xe4] sm:$0xff]
    %v1522 = vld [vmem:[#allocation11 + $0xec] sm:$0xf]
    %v1523 = vld [vmem:[#allocation11 + $0xf0] sm:$0xff]
    %v1524 = vld [vmem:[#allocation11 + $0xf8] sm:$0xf]
    %v1525 = vld [vmem:[#allocation11 + $0xfc] sm:$0xff]
    %v1526 = vld [vmem:[#allocation11 + $0x104] sm:$0xf]
    %v1527 = vld [vmem:[#allocation11 + $0x108] sm:$0xff]
    %v1528 = vld [vmem:[#allocation11 + $0x110] sm:$0xf]
    %v1529 = vld [vmem:[#allocation11 + $0x114] sm:$0xff]
    %v1530 = vld [vmem:[#allocation11 + $0x11c] sm:$0xf]
    %v1531 = vld [vmem:[#allocation11 + $0x120] sm:$0xff]
    %v1532 = vld [vmem:[#allocation11 + $0x128] sm:$0xf]
    %v1533 = vld [vmem:[#allocation11 + $0x12c] sm:$0xff]
    %v1534 = vld [vmem:[#allocation11 + $0x134] sm:$0xf]
    %v1535 = vld [vmem:[#allocation11 + $0x138] sm:$0xff]
    %v1536 = vld [vmem:[#allocation11 + $0x140] sm:$0xf]
    %v1537 = vld [vmem:[#allocation11 + $0x144] sm:$0xff]
    %v1538 = vld [vmem:[#allocation11 + $0x14c] sm:$0xf]
    %v1539 = vld [vmem:[#allocation11 + $0x150] sm:$0xff]
    %v1540 = vld [vmem:[#allocation11 + $0x158] sm:$0xf]
    %v1541 = vld [vmem:[#allocation11 + $0x15c] sm:$0xff]
    %v1542 = vld [vmem:[#allocation11 + $0x164] sm:$0xf]
    %v1543 = vld [vmem:[#allocation11 + $0x168] sm:$0xff]
    %v1544 = vld [vmem:[#allocation11 + $0x170] sm:$0xf]
    %v1545 = vld [vmem:[#allocation11 + $0x174] sm:$0xff]
    %v1546 = vld [vmem:[#allocation11 + $0x17c] sm:$0xf]
    %v1547 = vld [vmem:[#allocation11 + $0x180] sm:$0xff]
    %v1548 = vld [vmem:[#allocation11 + $0x188] sm:$0xf]
    %v1549 = vld [vmem:[#allocation11 + $0x18c] sm:$0xff]
    %v1550 = vld [vmem:[#allocation11 + $0x194] sm:$0xf]
    %v1551 = vld [vmem:[#allocation11 + $0x198] sm:$0xff]
    %v1552 = vld [vmem:[#allocation11 + $0x1a0] sm:$0xf]
    %v1553 = vld [vmem:[#allocation11 + $0x1a4] sm:$0xff]
    %v1554 = vld [vmem:[#allocation11 + $0x1ac] sm:$0xf]
    %v1555 = vld [vmem:[#allocation11 + $0x1b0] sm:$0xff]
    %v1556 = vld [vmem:[#allocation11 + $0x1b8] sm:$0xf]
    %v1557 = vld [vmem:[#allocation11 + $0x1bc] sm:$0xff]
    %v1558 = vld [vmem:[#allocation11 + $0x1c4] sm:$0xf]
    %v1559 = vld [vmem:[#allocation11 + $0x1c8] sm:$0xff]
    %v1560 = vld [vmem:[#allocation11 + $0x1d0] sm:$0xf]
    %v1561 = vld [vmem:[#allocation11 + $0x1d4] sm:$0xff]
    %v1562 = vld [vmem:[#allocation11 + $0x1dc] sm:$0xf]
    %v1563 = vld [vmem:[#allocation11 + $0x1e0] sm:$0xff]
    %v1564 = vld [vmem:[#allocation11 + $0x1e8] sm:$0xf]
    %v1565 = vld [vmem:[#allocation11 + $0x1ec] sm:$0xff]
    %v1566 = vld [vmem:[#allocation11 + $0x1f4] sm:$0xf]
    %v1567 = vld [vmem:[#allocation11 + $0x1f8] sm:$0xff]
    %v1568 = vld [vmem:[#allocation11 + $0x200] sm:$0xf]
    %v1569 = vld [vmem:[#allocation11 + $0x204] sm:$0xff]
    %v1570 = vld [vmem:[#allocation11 + $0x20c] sm:$0xf]
    %v1571 = vld [vmem:[#allocation11 + $0x210] sm:$0xff]
    %v1572 = vld [vmem:[#allocation11 + $0x218] sm:$0xf]
    %v1573 = vld [vmem:[#allocation11 + $0x21c] sm:$0xff]
    %v1574 = vld [vmem:[#allocation11 + $0x224] sm:$0xf]
    %v1575 = vld [vmem:[#allocation11 + $0x228] sm:$0xff]
    %v1576 = vld [vmem:[#allocation11 + $0x230] sm:$0xf]
    %v1577 = vld [vmem:[#allocation11 + $0x234] sm:$0xff]
    %v1578 = vld [vmem:[#allocation11 + $0x23c] sm:$0xf]
    %v1579 = vld [vmem:[#allocation11 + $0x240] sm:$0xff]
    %v1580 = vld [vmem:[#allocation11 + $0x248] sm:$0xf]
    %v1581 = vld [vmem:[#allocation11 + $0x24c] sm:$0xff]
    %v1582 = vld [vmem:[#allocation11 + $0x254] sm:$0xf]
    %v1583 = vld [vmem:[#allocation11 + $0x258] sm:$0xff]
    %v1584 = vld [vmem:[#allocation11 + $0x260] sm:$0xf]
    %v1585 = vld [vmem:[#allocation11 + $0x264] sm:$0xff]
    %v1586 = vld [vmem:[#allocation11 + $0x26c] sm:$0xf]
    %v1587 = vld [vmem:[#allocation11 + $0x270] sm:$0xff]
    %v1588 = vld [vmem:[#allocation11 + $0x278] sm:$0xf]
    %v1589 = vld [vmem:[#allocation11 + $0x27c] sm:$0xff]
    %v1590 = vld [vmem:[#allocation11 + $0x284] sm:$0xf]
    %v1591 = vld [vmem:[#allocation11 + $0x288] sm:$0xff]
    %v1592 = vld [vmem:[#allocation11 + $0x290] sm:$0xf]
    %v1593 = vld [vmem:[#allocation11 + $0x294] sm:$0xff]
    %v1594 = vld [vmem:[#allocation11 + $0x29c] sm:$0xf]
    %v1595 = vld [vmem:[#allocation11 + $0x2a0] sm:$0xff]
    %v1596 = vld [vmem:[#allocation11 + $0x2a8] sm:$0xf]
    %v1597 = vld [vmem:[#allocation11 + $0x2ac] sm:$0xff]
    %v1598 = vld [vmem:[#allocation11 + $0x2b4] sm:$0xf]
    %v1599 = vld [vmem:[#allocation11 + $0x2b8] sm:$0xff]
    %v1600 = vld [vmem:[#allocation11 + $0x2c0] sm:$0xf]
    %v1601 = vld [vmem:[#allocation11 + $0x2c4] sm:$0xff]
    %v1602 = vld [vmem:[#allocation11 + $0x2cc] sm:$0xf]
    %v1603 = vld [vmem:[#allocation11 + $0x2d0] sm:$0xff]
    %v1604 = vld [vmem:[#allocation11 + $0x2d8] sm:$0xf]
    %v1605 = vld [vmem:[#allocation11 + $0x2dc] sm:$0xff]
    %v1606 = vld [vmem:[#allocation11 + $0x2e4] sm:$0xf]
    %v1607 = vld [vmem:[#allocation11 + $0x2e8] sm:$0xff]
    %v1608 = vld [vmem:[#allocation11 + $0x2f0] sm:$0xf]
    %v1609 = vld [vmem:[#allocation11 + $0x2f4] sm:$0xff]
    %v1610 = vld [vmem:[#allocation11 + $0x2fc] sm:$0xf]
    %v1611 = vld [vmem:[#allocation12] sm:$0x7]
    %v1613 = vlaneseq
    %v1614 = vshrl.u32 %v1613, 7
    %v1615 = vsub.s32 0, %v1614
    %v1616 = vrot.slane %v1611, %v1615
    %v1617 = vlaneseq
    %v1618 = vshrl.u32 %v1617, 7
    %v1619 = vsub.s32 1, %v1618
    %v1620 = vrot.slane %v1611, %v1619
    %v1621 = vlaneseq
    %v1622 = vshrl.u32 %v1621, 7
    %v1623 = vsub.s32 2, %v1622
    %v1624 = vrot.slane %v1611, %v1623
    %v1756 = vunpack.c.l.b16 %v1483
    %v1757 = vunpack.c.h.b16 %v1483
    %v1758 = vunpack.c.l.b16 %v1484
    %v1759 = vunpack.c.l.b16 %v1485
    %v1760 = vunpack.c.h.b16 %v1485
    %v1761 = vunpack.c.l.b16 %v1486
    %v1762 = vunpack.c.l.b16 %v1487
    %v1763 = vunpack.c.h.b16 %v1487
    %v1764 = vunpack.c.l.b16 %v1488
    %v1765 = vunpack.c.l.b16 %v1489
    %v1766 = vunpack.c.h.b16 %v1489
    %v1767 = vunpack.c.l.b16 %v1490
    %v1768 = vunpack.c.l.b16 %v1491
    %v1769 = vunpack.c.h.b16 %v1491
    %v1770 = vunpack.c.l.b16 %v1492
    %v1771 = vunpack.c.l.b16 %v1493
    %v1772 = vunpack.c.h.b16 %v1493
    %v1773 = vunpack.c.l.b16 %v1494
    %v1774 = vunpack.c.l.b16 %v1495
    %v1775 = vunpack.c.h.b16 %v1495
    %v1776 = vunpack.c.l.b16 %v1496
    %v1777 = vunpack.c.l.b16 %v1497
    %v1778 = vunpack.c.h.b16 %v1497
    %v1779 = vunpack.c.l.b16 %v1498
    %v1780 = vunpack.c.l.b16 %v1499
    %v1781 = vunpack.c.h.b16 %v1499
    %v1782 = vunpack.c.l.b16 %v1500
    %v1783 = vunpack.c.l.b16 %v1501
    %v1784 = vunpack.c.h.b16 %v1501
    %v1785 = vunpack.c.l.b16 %v1502
    %v1786 = vunpack.c.l.b16 %v1503
    %v1787 = vunpack.c.h.b16 %v1503
    %v1788 = vunpack.c.l.b16 %v1504
    %v1789 = vunpack.c.l.b16 %v1505
    %v1790 = vunpack.c.h.b16 %v1505
    %v1791 = vunpack.c.l.b16 %v1506
    %v1792 = vunpack.c.l.b16 %v1507
    %v1793 = vunpack.c.h.b16 %v1507
    %v1794 = vunpack.c.l.b16 %v1508
    %v1795 = vunpack.c.l.b16 %v1509
    %v1796 = vunpack.c.h.b16 %v1509
    %v1797 = vunpack.c.l.b16 %v1510
    %v1798 = vunpack.c.l.b16 %v1511
    %v1799 = vunpack.c.h.b16 %v1511
    %v1800 = vunpack.c.l.b16 %v1512
    %v1801 = vunpack.c.l.b16 %v1513
    %v1802 = vunpack.c.h.b16 %v1513
    %v1803 = vunpack.c.l.b16 %v1514
    %v1804 = vunpack.c.l.b16 %v1515
    %v1805 = vunpack.c.h.b16 %v1515
    %v1806 = vunpack.c.l.b16 %v1516
    %v1807 = vunpack.c.l.b16 %v1517
    %v1808 = vunpack.c.h.b16 %v1517
    %v1809 = vunpack.c.l.b16 %v1518
    %v1810 = vunpack.c.l.b16 %v1519
    %v1811 = vunpack.c.h.b16 %v1519
    %v1812 = vunpack.c.l.b16 %v1520
    %v1813 = vunpack.c.l.b16 %v1521
    %v1814 = vunpack.c.h.b16 %v1521
    %v1815 = vunpack.c.l.b16 %v1522
    %v1816 = vunpack.c.l.b16 %v1523
    %v1817 = vunpack.c.h.b16 %v1523
    %v1818 = vunpack.c.l.b16 %v1524
    %v1819 = vunpack.c.l.b16 %v1525
    %v1820 = vunpack.c.h.b16 %v1525
    %v1821 = vunpack.c.l.b16 %v1526
    %v1822 = vunpack.c.l.b16 %v1527
    %v1823 = vunpack.c.h.b16 %v1527
    %v1824 = vunpack.c.l.b16 %v1528
    %v1825 = vunpack.c.l.b16 %v1529
    %v1826 = vunpack.c.h.b16 %v1529
    %v1827 = vunpack.c.l.b16 %v1530
    %v1828 = vunpack.c.l.b16 %v1531
    %v1829 = vunpack.c.h.b16 %v1531
    %v1830 = vunpack.c.l.b16 %v1532
    %v1831 = vunpack.c.l.b16 %v1533
    %v1832 = vunpack.c.h.b16 %v1533
    %v1833 = vunpack.c.l.b16 %v1534
    %v1834 = vunpack.c.l.b16 %v1535
    %v1835 = vunpack.c.h.b16 %v1535
    %v1836 = vunpack.c.l.b16 %v1536
    %v1837 = vunpack.c.l.b16 %v1537
    %v1838 = vunpack.c.h.b16 %v1537
    %v1839 = vunpack.c.l.b16 %v1538
    %v1840 = vunpack.c.l.b16 %v1539
    %v1841 = vunpack.c.h.b16 %v1539
    %v1842 = vunpack.c.l.b16 %v1540
    %v1843 = vunpack.c.l.b16 %v1541
    %v1844 = vunpack.c.h.b16 %v1541
    %v1845 = vunpack.c.l.b16 %v1542
    %v1846 = vunpack.c.l.b16 %v1543
    %v1847 = vunpack.c.h.b16 %v1543
    %v1848 = vunpack.c.l.b16 %v1544
    %v1849 = vunpack.c.l.b16 %v1545
    %v1850 = vunpack.c.h.b16 %v1545
    %v1851 = vunpack.c.l.b16 %v1546
    %v1852 = vunpack.c.l.b16 %v1547
    %v1853 = vunpack.c.h.b16 %v1547
    %v1854 = vunpack.c.l.b16 %v1548
    %v1855 = vunpack.c.l.b16 %v1549
    %v1856 = vunpack.c.h.b16 %v1549
    %v1857 = vunpack.c.l.b16 %v1550
    %v1858 = vunpack.c.l.b16 %v1551
    %v1859 = vunpack.c.h.b16 %v1551
    %v1860 = vunpack.c.l.b16 %v1552
    %v1861 = vunpack.c.l.b16 %v1553
    %v1862 = vunpack.c.h.b16 %v1553
    %v1863 = vunpack.c.l.b16 %v1554
    %v1864 = vunpack.c.l.b16 %v1555
    %v1865 = vunpack.c.h.b16 %v1555
    %v1866 = vunpack.c.l.b16 %v1556
    %v1867 = vunpack.c.l.b16 %v1557
    %v1868 = vunpack.c.h.b16 %v1557
    %v1869 = vunpack.c.l.b16 %v1558
    %v1870 = vunpack.c.l.b16 %v1559
    %v1871 = vunpack.c.h.b16 %v1559
    %v1872 = vunpack.c.l.b16 %v1560
    %v1873 = vunpack.c.l.b16 %v1561
    %v1874 = vunpack.c.h.b16 %v1561
    %v1875 = vunpack.c.l.b16 %v1562
    %v1876 = vunpack.c.l.b16 %v1563
    %v1877 = vunpack.c.h.b16 %v1563
    %v1878 = vunpack.c.l.b16 %v1564
    %v1879 = vunpack.c.l.b16 %v1565
    %v1880 = vunpack.c.h.b16 %v1565
    %v1881 = vunpack.c.l.b16 %v1566
    %v1882 = vunpack.c.l.b16 %v1567
    %v1883 = vunpack.c.h.b16 %v1567
    %v1884 = vunpack.c.l.b16 %v1568
    %v1885 = vunpack.c.l.b16 %v1569
    %v1886 = vunpack.c.h.b16 %v1569
    %v1887 = vunpack.c.l.b16 %v1570
    %v1888 = vunpack.c.l.b16 %v1571
    %v1889 = vunpack.c.h.b16 %v1571
    %v1890 = vunpack.c.l.b16 %v1572
    %v1891 = vunpack.c.l.b16 %v1573
    %v1892 = vunpack.c.h.b16 %v1573
    %v1893 = vunpack.c.l.b16 %v1574
    %v1894 = vunpack.c.l.b16 %v1575
    %v1895 = vunpack.c.h.b16 %v1575
    %v1896 = vunpack.c.l.b16 %v1576
    %v1897 = vunpack.c.l.b16 %v1577
    %v1898 = vunpack.c.h.b16 %v1577
    %v1899 = vunpack.c.l.b16 %v1578
    %v1900 = vunpack.c.l.b16 %v1579
    %v1901 = vunpack.c.h.b16 %v1579
    %v1902 = vunpack.c.l.b16 %v1580
    %v1903 = vunpack.c.l.b16 %v1581
    %v1904 = vunpack.c.h.b16 %v1581
    %v1905 = vunpack.c.l.b16 %v1582
    %v1906 = vunpack.c.l.b16 %v1583
    %v1907 = vunpack.c.h.b16 %v1583
    %v1908 = vunpack.c.l.b16 %v1584
    %v1909 = vunpack.c.l.b16 %v1585
    %v1910 = vunpack.c.h.b16 %v1585
    %v1911 = vunpack.c.l.b16 %v1586
    %v1912 = vunpack.c.l.b16 %v1587
    %v1913 = vunpack.c.h.b16 %v1587
    %v1914 = vunpack.c.l.b16 %v1588
    %v1915 = vunpack.c.l.b16 %v1589
    %v1916 = vunpack.c.h.b16 %v1589
    %v1917 = vunpack.c.l.b16 %v1590
    %v1918 = vunpack.c.l.b16 %v1591
    %v1919 = vunpack.c.h.b16 %v1591
    %v1920 = vunpack.c.l.b16 %v1592
    %v1921 = vunpack.c.l.b16 %v1593
    %v1922 = vunpack.c.h.b16 %v1593
    %v1923 = vunpack.c.l.b16 %v1594
    %v1924 = vunpack.c.l.b16 %v1595
    %v1925 = vunpack.c.h.b16 %v1595
    %v1926 = vunpack.c.l.b16 %v1596
    %v1927 = vunpack.c.l.b16 %v1597
    %v1928 = vunpack.c.h.b16 %v1597
    %v1929 = vunpack.c.l.b16 %v1598
    %v1930 = vunpack.c.l.b16 %v1599
    %v1931 = vunpack.c.h.b16 %v1599
    %v1932 = vunpack.c.l.b16 %v1600
    %v1933 = vunpack.c.l.b16 %v1601
    %v1934 = vunpack.c.h.b16 %v1601
    %v1935 = vunpack.c.l.b16 %v1602
    %v1936 = vunpack.c.l.b16 %v1603
    %v1937 = vunpack.c.h.b16 %v1603
    %v1938 = vunpack.c.l.b16 %v1604
    %v1939 = vunpack.c.l.b16 %v1605
    %v1940 = vunpack.c.h.b16 %v1605
    %v1941 = vunpack.c.l.b16 %v1606
    %v1942 = vunpack.c.l.b16 %v1607
    %v1943 = vunpack.c.h.b16 %v1607
    %v1944 = vunpack.c.l.b16 %v1608
    %v1945 = vunpack.c.l.b16 %v1609
    %v1946 = vunpack.c.h.b16 %v1609
    %v1947 = vunpack.c.l.b16 %v1610
    %v1948 = vpack.c.b16 %v1759, %v1756
    %v1949 = vpack.c.b16 %v1760, %v1757
    %v1950 = vpack.c.b16 %v1761, %v1758
    %v1951 = vpack.c.b16 %v1765, %v1762
    %v1952 = vpack.c.b16 %v1766, %v1763
    %v1953 = vpack.c.b16 %v1767, %v1764
    %v1954 = vpack.c.b16 %v1771, %v1768
    %v1955 = vpack.c.b16 %v1772, %v1769
    %v1956 = vpack.c.b16 %v1773, %v1770
    %v1957 = vpack.c.b16 %v1777, %v1774
    %v1958 = vpack.c.b16 %v1778, %v1775
    %v1959 = vpack.c.b16 %v1779, %v1776
    %v1960 = vpack.c.b16 %v1783, %v1780
    %v1961 = vpack.c.b16 %v1784, %v1781
    %v1962 = vpack.c.b16 %v1785, %v1782
    %v1963 = vpack.c.b16 %v1789, %v1786
    %v1964 = vpack.c.b16 %v1790, %v1787
    %v1965 = vpack.c.b16 %v1791, %v1788
    %v1966 = vpack.c.b16 %v1795, %v1792
    %v1967 = vpack.c.b16 %v1796, %v1793
    %v1968 = vpack.c.b16 %v1797, %v1794
    %v1969 = vpack.c.b16 %v1801, %v1798
    %v1970 = vpack.c.b16 %v1802, %v1799
    %v1971 = vpack.c.b16 %v1803, %v1800
    %v1972 = vpack.c.b16 %v1807, %v1804
    %v1973 = vpack.c.b16 %v1808, %v1805
    %v1974 = vpack.c.b16 %v1809, %v1806
    %v1975 = vpack.c.b16 %v1813, %v1810
    %v1976 = vpack.c.b16 %v1814, %v1811
    %v1977 = vpack.c.b16 %v1815, %v1812
    %v1978 = vpack.c.b16 %v1819, %v1816
    %v1979 = vpack.c.b16 %v1820, %v1817
    %v1980 = vpack.c.b16 %v1821, %v1818
    %v1981 = vpack.c.b16 %v1825, %v1822
    %v1982 = vpack.c.b16 %v1826, %v1823
    %v1983 = vpack.c.b16 %v1827, %v1824
    %v1984 = vpack.c.b16 %v1831, %v1828
    %v1985 = vpack.c.b16 %v1832, %v1829
    %v1986 = vpack.c.b16 %v1833, %v1830
    %v1987 = vpack.c.b16 %v1837, %v1834
    %v1988 = vpack.c.b16 %v1838, %v1835
    %v1989 = vpack.c.b16 %v1839, %v1836
    %v1990 = vpack.c.b16 %v1843, %v1840
    %v1991 = vpack.c.b16 %v1844, %v1841
    %v1992 = vpack.c.b16 %v1845, %v1842
    %v1993 = vpack.c.b16 %v1849, %v1846
    %v1994 = vpack.c.b16 %v1850, %v1847
    %v1995 = vpack.c.b16 %v1851, %v1848
    %v1996 = vpack.c.b16 %v1855, %v1852
    %v1997 = vpack.c.b16 %v1856, %v1853
    %v1998 = vpack.c.b16 %v1857, %v1854
    %v1999 = vpack.c.b16 %v1861, %v1858
    %v2000 = vpack.c.b16 %v1862, %v1859
    %v2001 = vpack.c.b16 %v1863, %v1860
    %v2002 = vpack.c.b16 %v1867, %v1864
    %v2003 = vpack.c.b16 %v1868, %v1865
    %v2004 = vpack.c.b16 %v1869, %v1866
    %v2005 = vpack.c.b16 %v1873, %v1870
    %v2006 = vpack.c.b16 %v1874, %v1871
    %v2007 = vpack.c.b16 %v1875, %v1872
    %v2008 = vpack.c.b16 %v1879, %v1876
    %v2009 = vpack.c.b16 %v1880, %v1877
    %v2010 = vpack.c.b16 %v1881, %v1878
    %v2011 = vpack.c.b16 %v1885, %v1882
    %v2012 = vpack.c.b16 %v1886, %v1883
    %v2013 = vpack.c.b16 %v1887, %v1884
    %v2014 = vpack.c.b16 %v1891, %v1888
    %v2015 = vpack.c.b16 %v1892, %v1889
    %v2016 = vpack.c.b16 %v1893, %v1890
    %v2017 = vpack.c.b16 %v1897, %v1894
    %v2018 = vpack.c.b16 %v1898, %v1895
    %v2019 = vpack.c.b16 %v1899, %v1896
    %v2020 = vpack.c.b16 %v1903, %v1900
    %v2021 = vpack.c.b16 %v1904, %v1901
    %v2022 = vpack.c.b16 %v1905, %v1902
    %v2023 = vpack.c.b16 %v1909, %v1906
    %v2024 = vpack.c.b16 %v1910, %v1907
    %v2025 = vpack.c.b16 %v1911, %v1908
    %v2026 = vpack.c.b16 %v1915, %v1912
    %v2027 = vpack.c.b16 %v1916, %v1913
    %v2028 = vpack.c.b16 %v1917, %v1914
    %v2029 = vpack.c.b16 %v1921, %v1918
    %v2030 = vpack.c.b16 %v1922, %v1919
    %v2031 = vpack.c.b16 %v1923, %v1920
    %v2032 = vpack.c.b16 %v1927, %v1924
    %v2033 = vpack.c.b16 %v1928, %v1925
    %v2034 = vpack.c.b16 %v1929, %v1926
    %v2035 = vpack.c.b16 %v1933, %v1930
    %v2036 = vpack.c.b16 %v1934, %v1931
    %v2037 = vpack.c.b16 %v1935, %v1932
    %v2038 = vpack.c.b16 %v1939, %v1936
    %v2039 = vpack.c.b16 %v1940, %v1937
    %v2040 = vpack.c.b16 %v1941, %v1938
    %v2041 = vpack.c.b16 %v1945, %v1942
    %v2042 = vpack.c.b16 %v1946, %v1943
    %v2043 = vpack.c.b16 %v1947, %v1944
    %2140 = vmatprep.subr.bf16.mxu0 %v1970
    %2141 = vmatpush1.bf16.msra.mxu0 %v1969
    %2142 = vmatprep.subr.bf16.mxu0 %v1967
    %2143 = vmatpush1.bf16.msra.mxu0 %v1966
    %2144 = vmatprep.subr.bf16.mxu0 %v1964
    %2145 = vmatpush1.bf16.msra.mxu0 %v1963
    %2146 = vmatprep.subr.bf16.mxu0 %v1961
    %2147 = vmatpush1.bf16.msra.mxu0 %v1960
    %2148 = vmatprep.subr.bf16.mxu0 %v1958
    %2149 = vmatpush1.bf16.msra.mxu0 %v1957
    %2150 = vmatprep.subr.bf16.mxu0 %v1955
    %2151 = vmatpush1.bf16.msra.mxu0 %v1954
    %2152 = vmatprep.subr.bf16.mxu0 %v1952
    %2153 = vmatpush1.bf16.msra.mxu0 %v1951
    %2154 = vmatprep.subr.bf16.mxu0 %v1949
    %2155 = vmatpush1.bf16.msra.mxu0 %v1948
    %2156 = vmatprep.subr.bf16.mxu0 %v1994
    %2157 = vmatpush2.bf16.msra.mxu0 %v1993
    %2158 = vmatprep.subr.bf16.mxu0 %v1991
    %2159 = vmatpush2.bf16.msra.mxu0 %v1990
    %2160 = vmatprep.subr.bf16.mxu0 %v1988
    %2161 = vmatpush2.bf16.msra.mxu0 %v1987
    %2162 = vmatprep.subr.bf16.mxu0 %v1985
    %2163 = vmatpush2.bf16.msra.mxu0 %v1984
    %2164 = vmatprep.subr.bf16.mxu0 %v1982
    %2165 = vmatpush2.bf16.msra.mxu0 %v1981
    %2166 = vmatprep.subr.bf16.mxu0 %v1979
    %2167 = vmatpush2.bf16.msra.mxu0 %v1978
    %2168 = vmatprep.subr.bf16.mxu0 %v1976
    %2169 = vmatpush2.bf16.msra.mxu0 %v1975
    %2170 = vmatprep.subr.bf16.mxu0 %v1973
    %2171 = vmatpush2.bf16.msra.mxu0 %v1972
    %2172 = vmatprep.mubr.bf16.mxu0 %v658
    %2173 = vmatmul.mubr.bf16.gmra.mxu0 %v657
    %v2174 = vpop.f32.mrf.mxu0
    %v2175 = vadd.f32 %v1616, %v2174
    %v2176 = vpop.f32.mrf.mxu0
    %v2177 = vadd.f32 %v1620, %v2176
    %v2178 = vpop.f32.mrf.mxu0
    %v2179 = vpop.f32.mrf.mxu0
    %2180 = vdwg.mxu0
    %2181 = vmatprep.subr.bf16.mxu0 %v2018
    %2182 = vmatpush1.bf16.msra.mxu0 %v2017
    %2183 = vmatprep.subr.bf16.mxu0 %v2015
    %2184 = vmatpush1.bf16.msra.mxu0 %v2014
    %2185 = vmatprep.subr.bf16.mxu0 %v2012
    %2186 = vmatpush1.bf16.msra.mxu0 %v2011
    %2187 = vmatprep.subr.bf16.mxu0 %v2009
    %2188 = vmatpush1.bf16.msra.mxu0 %v2008
    %2189 = vmatprep.subr.bf16.mxu0 %v2006
    %2190 = vmatpush1.bf16.msra.mxu0 %v2005
    %2191 = vmatprep.subr.bf16.mxu0 %v2003
    %2192 = vmatpush1.bf16.msra.mxu0 %v2002
    %2193 = vmatprep.subr.bf16.mxu0 %v2000
    %2194 = vmatpush1.bf16.msra.mxu0 %v1999
    %2195 = vmatprep.subr.bf16.mxu0 %v1997
    %2196 = vmatpush1.bf16.msra.mxu0 %v1996
    %2197 = vmatprep.subr.bf16.mxu0 %v2042
    %2198 = vmatpush2.bf16.msra.mxu0 %v2041
    %2199 = vmatprep.subr.bf16.mxu0 %v2039
    %2200 = vmatpush2.bf16.msra.mxu0 %v2038
    %2201 = vmatprep.subr.bf16.mxu0 %v2036
    %2202 = vmatpush2.bf16.msra.mxu0 %v2035
    %2203 = vmatprep.subr.bf16.mxu0 %v2033
    %2204 = vmatpush2.bf16.msra.mxu0 %v2032
    %2205 = vmatprep.subr.bf16.mxu0 %v2030
    %2206 = vmatpush2.bf16.msra.mxu0 %v2029
    %2207 = vmatprep.subr.bf16.mxu0 %v2027
    %2208 = vmatpush2.bf16.msra.mxu0 %v2026
    %2209 = vmatprep.subr.bf16.mxu0 %v2024
    %2210 = vmatpush2.bf16.msra.mxu0 %v2023
    %2211 = vmatprep.subr.bf16.mxu0 %v2021
    %2212 = vmatpush2.bf16.msra.mxu0 %v2020
    %2213 = vmatprep.mubr.bf16.mxu0 %v660
    %2214 = vmatmul.mubr.bf16.gmra.mxu0 %v659
    %v2215 = vpop.f32.mrf.mxu0
    %v2216 = vadd.f32 %v2175, %v2215
    %v2217 = vpop.f32.mrf.mxu0
    %v2218 = vadd.f32 %v2177, %v2217
    %v2219 = vpop.f32.mrf.mxu0
    %v2220 = vpop.f32.mrf.mxu0
    %2221 = vdwg.mxu0
    %2222 = vmatprep.subr.bf16.mxu0 0
    %2223 = vmatpush1.bf16.msra.mxu0 %v1971
    %2224 = vmatprep.subr.bf16.mxu0 0
    %2225 = vmatpush1.bf16.msra.mxu0 %v1968
    %2226 = vmatprep.subr.bf16.mxu0 0
    %2227 = vmatpush1.bf16.msra.mxu0 %v1965
    %2228 = vmatprep.subr.bf16.mxu0 0
    %2229 = vmatpush1.bf16.msra.mxu0 %v1962
    %2230 = vmatprep.subr.bf16.mxu0 0
    %2231 = vmatpush1.bf16.msra.mxu0 %v1959
    %2232 = vmatprep.subr.bf16.mxu0 0
    %2233 = vmatpush1.bf16.msra.mxu0 %v1956
    %2234 = vmatprep.subr.bf16.mxu0 0
    %2235 = vmatpush1.bf16.msra.mxu0 %v1953
    %2236 = vmatprep.subr.bf16.mxu0 0
    %2237 = vmatpush1.bf16.msra.mxu0 %v1950
    %2238 = vmatprep.subr.bf16.mxu0 0
    %2239 = vmatpush2.bf16.msra.mxu0 %v1995
    %2240 = vmatprep.subr.bf16.mxu0 0
    %2241 = vmatpush2.bf16.msra.mxu0 %v1992
    %2242 = vmatprep.subr.bf16.mxu0 0
    %2243 = vmatpush2.bf16.msra.mxu0 %v1989
    %2244 = vmatprep.subr.bf16.mxu0 0
    %2245 = vmatpush2.bf16.msra.mxu0 %v1986
    %2246 = vmatprep.subr.bf16.mxu0 0
    %2247 = vmatpush2.bf16.msra.mxu0 %v1983
    %2248 = vmatprep.subr.bf16.mxu0 0
    %2249 = vmatpush2.bf16.msra.mxu0 %v1980
    %2250 = vmatprep.subr.bf16.mxu0 0
    %2251 = vmatpush2.bf16.msra.mxu0 %v1977
    %2252 = vmatprep.subr.bf16.mxu0 0
    %2253 = vmatpush2.bf16.msra.mxu0 %v1974
    %2254 = vmatprep.mubr.bf16.mxu0 %v658
    %2255 = vmatmul.mubr.bf16.gmra.mxu0 %v657
    %v2256 = vpop.f32.mrf.mxu0
    %v2257 = vadd.f32 %v1624, %v2256
    %v2258 = vpop.f32.mrf.mxu0
    %v2259 = vpop.f32.mrf.mxu0
    %v2260 = vpop.f32.mrf.mxu0
    %2261 = vdwg.mxu0
    %2262 = vmatprep.subr.bf16.mxu0 0
    %2263 = vmatpush1.bf16.msra.mxu0 %v2019
    %2264 = vmatprep.subr.bf16.mxu0 0
    %2265 = vmatpush1.bf16.msra.mxu0 %v2016
    %2266 = vmatprep.subr.bf16.mxu0 0
    %2267 = vmatpush1.bf16.msra.mxu0 %v2013
    %2268 = vmatprep.subr.bf16.mxu0 0
    %2269 = vmatpush1.bf16.msra.mxu0 %v2010
    %2270 = vmatprep.subr.bf16.mxu0 0
    %2271 = vmatpush1.bf16.msra.mxu0 %v2007
    %2272 = vmatprep.subr.bf16.mxu0 0
    %2273 = vmatpush1.bf16.msra.mxu0 %v2004
    %2274 = vmatprep.subr.bf16.mxu0 0
    %2275 = vmatpush1.bf16.msra.mxu0 %v2001
    %2276 = vmatprep.subr.bf16.mxu0 0
    %2277 = vmatpush1.bf16.msra.mxu0 %v1998
    %2278 = vmatprep.subr.bf16.mxu0 0
    %2279 = vmatpush2.bf16.msra.mxu0 %v2043
    %2280 = vmatprep.subr.bf16.mxu0 0
    %2281 = vmatpush2.bf16.msra.mxu0 %v2040
    %2282 = vmatprep.subr.bf16.mxu0 0
    %2283 = vmatpush2.bf16.msra.mxu0 %v2037
    %2284 = vmatprep.subr.bf16.mxu0 0
    %2285 = vmatpush2.bf16.msra.mxu0 %v2034
    %2286 = vmatprep.subr.bf16.mxu0 0
    %2287 = vmatpush2.bf16.msra.mxu0 %v2031
    %2288 = vmatprep.subr.bf16.mxu0 0
    %2289 = vmatpush2.bf16.msra.mxu0 %v2028
    %2290 = vmatprep.subr.bf16.mxu0 0
    %2291 = vmatpush2.bf16.msra.mxu0 %v2025
    %2292 = vmatprep.subr.bf16.mxu0 0
    %2293 = vmatpush2.bf16.msra.mxu0 %v2022
    %2294 = vmatprep.mubr.bf16.mxu0 %v660
    %2295 = vmatmul.mubr.bf16.gmra.mxu0 %v659
    %v2296 = vpop.f32.mrf.mxu0
    %v2297 = vadd.f32 %v2257, %v2296
    %v2298 = vpop.f32.mrf.mxu0
    %v2299 = vpop.f32.mrf.mxu0
    %v2300 = vpop.f32.mrf.mxu0
    %2301 = vdwg.mxu0
    %v2302 = vmax.f32 %v2216, 0.0
    %v2303 = vmax.f32 %v2218, 0.0
    %v2304 = vmax.f32 %v2297, 0.0
    %v2305 = vld [vmem:[%s9] sm:$0x7]
    %v2307 = vlaneseq
    %v2308 = vshrl.u32 %v2307, 7
    %v2309 = vsub.s32 0, %v2308
    %v2310 = vrot.slane %v2305, %v2309
    %v2311 = vlaneseq
    %v2312 = vshrl.u32 %v2311, 7
    %v2313 = vsub.s32 1, %v2312
    %v2314 = vrot.slane %v2305, %v2313
    %v2315 = vlaneseq
    %v2316 = vshrl.u32 %v2315, 7
    %v2317 = vsub.s32 2, %v2316
    %v2318 = vrot.slane %v2305, %v2317
    %v2322 = vmul.f32 %v1480, %v2310
    %v2323 = vmul.f32 %v1481, %v2314
    %v2324 = vmul.f32 %v1482, %v2318
    %v2325 = vadd.f32 %v2322, %v2323
    %v2326 = vadd.f32 %v2325, %v2324
    %2327 = vadd.xlane.f32.xlu0 %v2326
    %v2328 = vpop.xlane.xlu0 %2327
    %v2329 = vld [vmem:[#allocation2] sm:$0x1]
    %v2331 = vlaneseq
    %v2332 = vshrl.u32 %v2331, 7
    %v2333 = vsub.s32 0, %v2332
    %v2334 = vrot.slane %v2329, %v2333
    %v2336 = vadd.f32 %v2328, %v2334
    %v2337 = vld [vmem:[%s11] sm:$0x7]
    %v2339 = vlaneseq
    %v2340 = vshrl.u32 %v2339, 7
    %v2341 = vsub.s32 0, %v2340
    %v2342 = vrot.slane %v2337, %v2341
    %v2343 = vlaneseq
    %v2344 = vshrl.u32 %v2343, 7
    %v2345 = vsub.s32 1, %v2344
    %v2346 = vrot.slane %v2337, %v2345
    %v2347 = vlaneseq
    %v2348 = vshrl.u32 %v2347, 7
    %v2349 = vsub.s32 2, %v2348
    %v2350 = vrot.slane %v2337, %v2349
    %v2354 = vmul.f32 %v2302, %v2342
    %v2355 = vmul.f32 %v2303, %v2346
    %v2356 = vmul.f32 %v2304, %v2350
    %v2357 = vadd.f32 %v2354, %v2355
    %v2358 = vadd.f32 %v2357, %v2356
    %2359 = vadd.xlane.f32.xlu0 %v2358
    %v2360 = vpop.xlane.xlu0 %2359
    %v2361 = vld [vmem:[#allocation3] sm:$0x1]
    %v2363 = vlaneseq
    %v2364 = vshrl.u32 %v2363, 7
    %v2365 = vsub.s32 0, %v2364
    %v2366 = vrot.slane %v2361, %v2365
    %v2368 = vadd.f32 %v2360, %v2366
    %vm2369 = vcmask 7168
    %2370 = vst.msk [vmem:[%s13] sm:$0xff] %vm2369, %v2336
    %s2371 = scalar_lea.vmem %s13, 8
    %2372 = vst.msk [vmem:[%s2371] sm:$0xff] %vm2369, %v2368
    %v2373 = vsub.f32 %v2336, %v2368
    %v2374 = vand.u32 2147483647, %v2373
    %v2375 = vmul.f32 %v2374, 0.5
    %2376 = vst.msk [vmem:[%s14] sm:$0xff] %vm2369, %v2375
    // Predicated region
    $region78: #{ensemble_critic_forward.1} parent=1 // pred_check
      _
    $region79: #{ensemble_critic_forward.1} parent=1 // pred_check_branch
      %2378 = sbr.rel (0) target = $region81
    $region80: #{ensemble_critic_forward.1} parent=1 // pred_region
      _
    $region81: #{ensemble_critic_forward.1} parent=1 // pred_fallthru
      _
    // Predicated region
    $region82: #{ensemble_critic_forward.1} parent=1 // pred_check
      _
    $region83: #{ensemble_critic_forward.1} parent=1 // pred_check_branch
      %2380 = sbr.rel (0) target = $region85
    $region84: #{ensemble_critic_forward.1} parent=1 // pred_region
      _
    $region85: #{ensemble_critic_forward.1} parent=1 // pred_fallthru
      _
    // Predicated region
    $region86: #{ensemble_critic_forward.1} parent=1 // pred_check
      _
    $region87: #{ensemble_critic_forward.1} parent=1 // pred_check_branch
      %2382 = sbr.rel (0) target = $region89
    $region88: #{ensemble_critic_forward.1} parent=1 // pred_region
      _
    $region89: #{ensemble_critic_forward.1} parent=1 // pred_fallthru
      _
    // Predicated region
    $region90: #{ensemble_critic_forward.1} parent=1 // pred_check
      _
    $region91: #{ensemble_critic_forward.1} parent=1 // pred_check_branch
      %2384 = sbr.rel (0) target = $region93
    $region92: #{ensemble_critic_forward.1} parent=1 // pred_region
      _
    $region93: #{ensemble_critic_forward.1} parent=1 // pred_fallthru
      _
    %2385 = vsyncpa [#allocation5], 1
    %2386 = vsyncpa [#allocation7], 1
    %2387 = vsyncpa [#allocation10], 1
    %2388 = vsyncpa [#allocation13], 1

</llo_original>
